<compile_context>
chip_gen: v7x
topology: tpu7x:2x2x1
jax: 0.10.0
libtpu: 0.0.40
codegen_flags: <defaults>
</compile_context>

<pallas_src>
import jax
import jax.numpy as jnp
import numpy as np
from jax.experimental import pallas as pl
from jax.experimental.pallas import tpu as pltpu

# ----------------------------- hyper-params (small) -----------------------------
NUM_CLASSES = 7          # len(class_labels)
VOCAB_SIZE = 50
EMBED_SIZE = 16          # embedding_size (scaled down from 64)
NUM_HIDDEN = 16          # num_hidden     (scaled down from 64)
MAX_LEN = 8              # max_len        (scaled down from 6300)
BATCH = 2                # PyTorch dim-0 axis the nn.LSTM recurs over


# --------------------------------- Pallas kernels --------------------------------
def _xproj_kernel(x_ref, w_ref, b_ref, o_ref):
    # out[d, t] = W_ih[d] @ x_t + (b_ih + b_hh)[d]   -- all gates, fully parallel in (d, t)
    o_ref[...] = (jnp.dot(w_ref[...], x_ref[...], preferred_element_type=jnp.float32)
                  + b_ref[...])


def _lstm_kernel(xg_ref, whh_ref, out_ref, h_ref, c_ref):
    """One grid step = one cell update for (l-tile, direction d, time step t)."""
    t = pl.program_id(2)
    H = h_ref.shape[0]

    @pl.when(t == 0)
    def _():                                   # fresh state for every (l-tile, direction)
        h_ref[...] = jnp.zeros_like(h_ref)
        c_ref[...] = jnp.zeros_like(c_ref)

    # All four gates in a single fused MXU matmul: (4H, H) @ (H, TL) -> (4H, TL);
    # the x-projection (incl. both biases) was precomputed outside the recurrence.
    gates = xg_ref[...] + jnp.dot(whh_ref[...], h_ref[...],
                                  preferred_element_type=jnp.float32)
    # PyTorch gate order i, f, g, o -- sublane-aligned slices of the fused result.
    i = jax.nn.sigmoid(gates[0 * H:1 * H, :])
    f = jax.nn.sigmoid(gates[1 * H:2 * H, :])
    g = jnp.tanh(gates[2 * H:3 * H, :])
    o = jax.nn.sigmoid(gates[3 * H:4 * H, :])

    c_new = f * c_ref[...] + i * g
    h_new = o * jnp.tanh(c_new)
    c_ref[...] = c_new
    h_ref[...] = h_new
    out_ref[...] = h_new


def _linear_kernel(x_ref, w_ref, b_ref, o_ref):
    # K-tiled matmul with a resident (T, C) accumulator (output block index is constant).
    @pl.when(pl.program_id(0) == 0)
    def _():
        o_ref[...] = jnp.broadcast_to(b_ref[...], o_ref.shape)
    o_ref[...] += jnp.dot(x_ref[...], w_ref[...], preferred_element_type=jnp.float32)


# --------------------------------- wrappers ---------------------------------
def xproj_pallas(emb_tel, wih, b):
    """emb_tel: (T, E, L); wih: (2, 4H, E); b: (2, 4H, 1)  ->  (2, T, 4H, L)."""
    T, E, L = emb_tel.shape
    G = wih.shape[1]                                   # 4H
    return pl.pallas_call(
        _xproj_kernel,
        out_shape=jax.ShapeDtypeStruct((2, T, G, L), jnp.float32),
        grid_spec=pltpu.PrefetchScalarGridSpec(
            num_scalar_prefetch=0,
            grid=(2, T),
            in_specs=[
                pl.BlockSpec((None, E, L), lambda d, t: (t, 0, 0)),
                pl.BlockSpec((None, G, E), lambda d, t: (d, 0, 0)),
                pl.BlockSpec((None, G, 1), lambda d, t: (d, 0, 0)),
            ],
            out_specs=pl.BlockSpec((None, None, G, L), lambda d, t: (d, t, 0, 0)),
        ),
        compiler_params=pltpu.CompilerParams(
            dimension_semantics=("parallel", "parallel")),
    )(emb_tel, wih, b)


def bidir_lstm_pallas(xg, whh, *, l_tile=None):
    """xg: (2, T, 4H, L) precomputed gate inputs; whh: (2, 4H, H).

    Returns hidden states (T, 2, H, L).  The L axis is a parallel, tileable grid axis
    (set l_tile to a multiple of 128 at production L to bound VMEM and enable megacore).
    """
    _, T, G, L = xg.shape
    H = whh.shape[2]
    TL = L if l_tile is None else l_tile
    assert L % TL == 0
    nlb = L // TL

    def t_idx(d, t):                       # d=0: forward time t; d=1: backward time T-1-t
        return t + d * (T - 1 - 2 * t)

    return pl.pallas_call(
        _lstm_kernel,
        out_shape=jax.ShapeDtypeStruct((T, 2, H, L), jnp.float32),
        grid_spec=pltpu.PrefetchScalarGridSpec(
            num_scalar_prefetch=0,
            grid=(nlb, 2, T),
            in_specs=[
                pl.BlockSpec((None, None, G, TL),
                             lambda lb, d, t: (d, t_idx(d, t), 0, lb)),
                pl.BlockSpec((None, G, H), lambda lb, d, t: (d, 0, 0)),
            ],
            out_specs=pl.BlockSpec((None, None, H, TL),
                                   lambda lb, d, t: (t_idx(d, t), d, 0, lb)),
            scratch_shapes=[pltpu.VMEM((H, TL), jnp.float32),    # h state
                            pltpu.VMEM((H, TL), jnp.float32)],   # c state
        ),
        compiler_params=pltpu.CompilerParams(
            dimension_semantics=("parallel", "parallel", "arbitrary")),
    )(xg, whh)


def linear_pallas(flat, w_t, b_row):
    """flat: (T, K); w_t: (K, C); b_row: (1, C).  K-tiled with a resident accumulator."""
    T, K = flat.shape
    C = w_t.shape[1]
    TK = 128 if K % 128 == 0 else K         # production K=2*H*L is a multiple of 128
    nk = K // TK
    return pl.pallas_call(
        _linear_kernel,
        out_shape=jax.ShapeDtypeStruct((T, C), jnp.float32),
        grid_spec=pltpu.PrefetchScalarGridSpec(
            num_scalar_prefetch=0,
            grid=(nk,),
            in_specs=[
                pl.BlockSpec((T, TK), lambda k: (0, k)),
                pl.BlockSpec((TK, C), lambda k: (k, 0)),
                pl.BlockSpec((1, C), lambda k: (0, 0)),
            ],
            out_specs=pl.BlockSpec((T, C), lambda k: (0, 0)),
        ),
        compiler_params=pltpu.CompilerParams(dimension_semantics=("arbitrary",)),
    )(flat, w_t, b_row)


@jax.jit
def model_forward(tokens, params):
    T, L = tokens.shape
    H = params["whh"].shape[2]
    # Embedding lookup (gather) -- plain JAX glue; transposed so E sits on sublanes and
    # the L rows sit on lanes (lane-dense at production L).
    emb = jnp.take(params["embedding"], tokens, axis=0)        # (T, L, E)
    emb_tel = jnp.swapaxes(emb, 1, 2)                          # (T, E, L)

    xg = xproj_pallas(emb_tel, params["wih"], params["b"])     # (2, T, 4H, L)
    hs = bidir_lstm_pallas(xg, params["whh"])                  # (T, 2, H, L)

    flat = hs.reshape(T, 2 * H * L)                            # zero-copy collapse
    return linear_pallas(flat, params["w_lin_kernel_t"], params["b_lin_row"])


# --------------------------------- reference ---------------------------------
def _lstm_dir_ref(emb, wih, whh, b):
    """emb: (T, L, E); wih: (4H, E); whh: (4H, H); b: (4H,) -- PyTorch cell equations."""
    H = whh.shape[1]
    L = emb.shape[1]

    def step(carry, x):
        h, c = carry
        g = x @ wih.T + h @ whh.T + b[None, :]                 # (L, 4H), gate order i,f,g,o
        i = jax.nn.sigmoid(g[:, 0 * H:1 * H])
        f = jax.nn.sigmoid(g[:, 1 * H:2 * H])
        gg = jnp.tanh(g[:, 2 * H:3 * H])
        o = jax.nn.sigmoid(g[:, 3 * H:4 * H])
        c2 = f * c + i * gg
        h2 = o * jnp.tanh(c2)
        return (h2, c2), h2

    init = (jnp.zeros((L, H), jnp.float32), jnp.zeros((L, H), jnp.float32))
    _, hs = jax.lax.scan(step, init, emb)
    return hs


def reference_forward(tokens, params):
    emb = params["embedding"][tokens]
    hs_f = _lstm_dir_ref(emb, params["wih"][0], params["whh"][0], params["b"][0, :, 0])
    hs_b = _lstm_dir_ref(emb[::-1], params["wih"][1], params["whh"][1],
                         params["b"][1, :, 0])[::-1]
    out = jnp.concatenate([hs_f, hs_b], axis=-1)               # (T, L, 2H)  PyTorch order
    flat = out.reshape(out.shape[0], -1)                       # x.flatten(start_dim=1)
    return flat @ params["w_lin_pt"].T + params["b_lin"][None, :]


# --------------------------------- param init ---------------------------------
def init_params(key):
    ks = jax.random.split(key, 10)
    E, H, L, V, C = EMBED_SIZE, NUM_HIDDEN, MAX_LEN, VOCAB_SIZE, NUM_CLASSES

    embedding = 0.1 * jax.random.normal(ks[0], (V, E), jnp.float32)
    embedding = embedding.at[0].set(0.0)                       # padding_idx=0 row is zero

    def lstm_dir(kw, ku, kb):
        # PyTorch layouts: weight_ih (4H, E), weight_hh (4H, H), gate order i,f,g,o.
        wih = 0.1 * jax.random.normal(kw, (4 * H, E), jnp.float32)
        whh = 0.1 * jax.random.normal(ku, (4 * H, H), jnp.float32)
        b_ih = 0.05 * jax.random.normal(kb, (4 * H,), jnp.float32)
        b_hh = 0.05 * jax.random.normal(jax.random.fold_in(kb, 1), (4 * H,), jnp.float32)
        return wih, whh, b_ih + b_hh                           # LSTM adds both biases

    wih_f, whh_f, b_f = lstm_dir(ks[1], ks[2], ks[3])
    wih_b, whh_b, b_b = lstm_dir(ks[4], ks[5], ks[6])

    wih = jnp.stack([wih_f, wih_b])                            # (2, 4H, E)
    whh = jnp.stack([whh_f, whh_b])                            # (2, 4H, H)
    b = jnp.stack([b_f, b_b])[:, :, None]                      # (2, 4H, 1)

    # PyTorch Linear: weight (C, 2*H*L) over the flatten order (l, dir, h).
    w_lin_pt = 0.05 * jax.random.normal(ks[7], (C, 2 * H * L), jnp.float32)
    b_lin = 0.05 * jax.random.normal(ks[8], (C,), jnp.float32)

    # One-time permutation of the Linear weight into the kernel's zero-copy flatten
    # order (dir, h, l), pre-transposed for `flat @ W`.
    w_k = w_lin_pt.reshape(C, L, 2, H).transpose(0, 2, 3, 1).reshape(C, 2 * H * L)

    return dict(embedding=embedding, wih=wih, whh=whh, b=b,
                w_lin_pt=w_lin_pt, b_lin=b_lin,
                w_lin_kernel_t=w_k.T,                          # (2*H*L, C)
                b_lin_row=b_lin[None, :])                      # (1, C)


# ------------------------------------ main ------------------------------------
if __name__ == "__main__":
    key = jax.random.PRNGKey(0)
    k_tok, k_par = jax.random.split(key)

    params = init_params(k_par)
    tokens = jax.random.randint(k_tok, (BATCH, MAX_LEN), 0, VOCAB_SIZE, dtype=jnp.int32)

    logits = jax.block_until_ready(model_forward(tokens, params))

    ref = jax.block_until_ready(reference_forward(tokens, params))
    np.testing.assert_allclose(np.asarray(logits), np.asarray(ref), rtol=2e-3, atol=2e-3)
    assert logits.shape == (BATCH, NUM_CLASSES)

    print("KERNEL_OK")
</pallas_src>

<mosaic_0001>
module attributes {stable_mosaic.version = 11 : i64} {
  func.func @_xproj_kernel(%arg0: i32, %arg1: i32, %arg2: memref<1x16x8xf32, #tpu.memory_space<vmem>>, %arg3: memref<1x64x16xf32, #tpu.memory_space<vmem>>, %arg4: memref<1x64x1xf32, #tpu.memory_space<vmem>>, %arg5: memref<1x1x64x8xf32, #tpu.memory_space<vmem>>) attributes {dimension_semantics = [#tpu.dimension_semantics<parallel>, #tpu.dimension_semantics<parallel>], iteration_bounds = array<i64: 2, 2>, scalar_prefetch = 0 : i64, scratch_operands = 0 : i64, tpu.core_type = #tpu.core_type<tc>, window_params = [{transform_indices = @transform_0, window_bounds = array<i64: 1, 16, 8>}, {transform_indices = @transform_1, window_bounds = array<i64: 1, 64, 16>}, {transform_indices = @transform_2, window_bounds = array<i64: 1, 64, 1>}, {transform_indices = @transform_3, window_bounds = array<i64: 1, 1, 64, 8>}]} {
    %c0 = arith.constant 0 : index
    %c0_0 = arith.constant 0 : index
    %c0_1 = arith.constant 0 : index
    %0 = vector.load %arg3[%c0, %c0_0, %c0_1] : memref<1x64x16xf32, #tpu.memory_space<vmem>>, vector<1x64x16xf32>
    %1 = vector.shape_cast %0 : vector<1x64x16xf32> to vector<64x16xf32>
    %c0_2 = arith.constant 0 : index
    %c0_3 = arith.constant 0 : index
    %c0_4 = arith.constant 0 : index
    %2 = vector.load %arg2[%c0_2, %c0_3, %c0_4] : memref<1x16x8xf32, #tpu.memory_space<vmem>>, vector<1x16x8xf32>
    %3 = vector.shape_cast %2 : vector<1x16x8xf32> to vector<16x8xf32>
    %cst = arith.constant dense<0.000000e+00> : vector<64x8xf32>
    %4 = tpu.matmul %1, %3, %cst {dimension_numbers = #tpu.dot_dimension_numbers<[1], [0], [0], [1], [0, 0, 1, 1], [], []>} : vector<64x16xf32>, vector<16x8xf32>, vector<64x8xf32> -> vector<64x8xf32>
    %c0_5 = arith.constant 0 : index
    %c0_6 = arith.constant 0 : index
    %c0_7 = arith.constant 0 : index
    %5 = vector.load %arg4[%c0_5, %c0_6, %c0_7] : memref<1x64x1xf32, #tpu.memory_space<vmem>>, vector<1x64x1xf32>
    %6 = vector.shape_cast %5 : vector<1x64x1xf32> to vector<64x1xf32>
    %7 = vector.broadcast %6 : vector<64x1xf32> to vector<64x8xf32>
    %8 = arith.addf %4, %7 : vector<64x8xf32>
    %c0_8 = arith.constant 0 : index
    %c0_9 = arith.constant 0 : index
    %c0_10 = arith.constant 0 : index
    %c0_11 = arith.constant 0 : index
    %9 = vector.load %arg5[%c0_8, %c0_9, %c0_10, %c0_11] : memref<1x1x64x8xf32, #tpu.memory_space<vmem>>, vector<1x1x64x8xf32>
    %10 = vector.shape_cast %9 : vector<1x1x64x8xf32> to vector<64x8xf32>
    %11 = vector.shape_cast %8 : vector<64x8xf32> to vector<1x1x64x8xf32>
    tpu.vector_store %arg5[%c0_8, %c0_9, %c0_10, %c0_11], %11 {strides = array<i32>} : memref<1x1x64x8xf32, #tpu.memory_space<vmem>>, vector<1x1x64x8xf32>,
    return
  }
  func.func @transform_0(%arg0: i32, %arg1: i32) -> (i32, i32, i32) {
    %c0_i32 = arith.constant 0 : i32
    %c0_i32_0 = arith.constant 0 : i32
    %c0_i32_1 = arith.constant 0 : i32
    return %arg1, %c0_i32, %c0_i32_0 : i32, i32, i32
  }
  func.func @transform_1(%arg0: i32, %arg1: i32) -> (i32, i32, i32) {
    %c0_i32 = arith.constant 0 : i32
    %c0_i32_0 = arith.constant 0 : i32
    %c0_i32_1 = arith.constant 0 : i32
    return %arg0, %c0_i32, %c0_i32_0 : i32, i32, i32
  }
  func.func @transform_2(%arg0: i32, %arg1: i32) -> (i32, i32, i32) {
    %c0_i32 = arith.constant 0 : i32
    %c0_i32_0 = arith.constant 0 : i32
    %c0_i32_1 = arith.constant 0 : i32
    return %arg0, %c0_i32, %c0_i32_0 : i32, i32, i32
  }
  func.func @transform_3(%arg0: i32, %arg1: i32) -> (i32, i32, i32, i32) {
    %c0_i32 = arith.constant 0 : i32
    %c0_i32_0 = arith.constant 0 : i32
    %c0_i32_1 = arith.constant 0 : i32
    return %arg0, %arg1, %c0_i32, %c0_i32_0 : i32, i32, i32, i32
  }
}

module attributes {stable_mosaic.version = 11 : i64} {
  func.func @_lstm_kernel(%arg0: i32, %arg1: i32, %arg2: i32, %arg3: memref<1x1x64x8xf32, #tpu.memory_space<vmem>>, %arg4: memref<1x64x16xf32, #tpu.memory_space<vmem>>, %arg5: memref<1x1x16x8xf32, #tpu.memory_space<vmem>>, %arg6: memref<16x8xf32, #tpu.memory_space<vmem>>, %arg7: memref<16x8xf32, #tpu.memory_space<vmem>>) attributes {dimension_semantics = [#tpu.dimension_semantics<parallel>, #tpu.dimension_semantics<parallel>, #tpu.dimension_semantics<arbitrary>], iteration_bounds = array<i64: 1, 2, 2>, scalar_prefetch = 0 : i64, scratch_operands = 2 : i64, tpu.core_type = #tpu.core_type<tc>, window_params = [{transform_indices = @transform_0, window_bounds = array<i64: 1, 1, 64, 8>}, {transform_indices = @transform_1, window_bounds = array<i64: 1, 64, 16>}, {transform_indices = @transform_2, window_bounds = array<i64: 1, 1, 16, 8>}]} {
    %c0_i32 = arith.constant 0 : i32
    %0 = arith.cmpi eq, %arg2, %c0_i32 : i32
    %1 = arith.extui %0 : i1 to i32
    %c0_i32_0 = arith.constant 0 : i32
    %2 = arith.cmpi ne, %1, %c0_i32_0 : i32
    scf.if %2 {
      %cst_22 = arith.constant 0.000000e+00 : f32
      %41 = vector.broadcast %cst_22 : f32 to vector<16x8xf32>
      %c0_23 = arith.constant 0 : index
      %c0_24 = arith.constant 0 : index
      %42 = vector.load %arg6[%c0_23, %c0_24] : memref<16x8xf32, #tpu.memory_space<vmem>>, vector<16x8xf32>
      tpu.vector_store %arg6[%c0_23, %c0_24], %41 {strides = array<i32>} : memref<16x8xf32, #tpu.memory_space<vmem>>, vector<16x8xf32>,
      %cst_25 = arith.constant 0.000000e+00 : f32
      %43 = vector.broadcast %cst_25 : f32 to vector<16x8xf32>
      %c0_26 = arith.constant 0 : index
      %c0_27 = arith.constant 0 : index
      %44 = vector.load %arg7[%c0_26, %c0_27] : memref<16x8xf32, #tpu.memory_space<vmem>>, vector<16x8xf32>
      tpu.vector_store %arg7[%c0_26, %c0_27], %43 {strides = array<i32>} : memref<16x8xf32, #tpu.memory_space<vmem>>, vector<16x8xf32>,
    } else {
    }
    %c0 = arith.constant 0 : index
    %c0_1 = arith.constant 0 : index
    %c0_2 = arith.constant 0 : index
    %c0_3 = arith.constant 0 : index
    %3 = vector.load %arg3[%c0, %c0_1, %c0_2, %c0_3] : memref<1x1x64x8xf32, #tpu.memory_space<vmem>>, vector<1x1x64x8xf32>
    %4 = vector.shape_cast %3 : vector<1x1x64x8xf32> to vector<64x8xf32>
    %c0_4 = arith.constant 0 : index
    %c0_5 = arith.constant 0 : index
    %c0_6 = arith.constant 0 : index
    %5 = vector.load %arg4[%c0_4, %c0_5, %c0_6] : memref<1x64x16xf32, #tpu.memory_space<vmem>>, vector<1x64x16xf32>
    %6 = vector.shape_cast %5 : vector<1x64x16xf32> to vector<64x16xf32>
    %c0_7 = arith.constant 0 : index
    %c0_8 = arith.constant 0 : index
    %7 = vector.load %arg6[%c0_7, %c0_8] : memref<16x8xf32, #tpu.memory_space<vmem>>, vector<16x8xf32>
    %cst = arith.constant dense<0.000000e+00> : vector<64x8xf32>
    %8 = tpu.matmul %6, %7, %cst {dimension_numbers = #tpu.dot_dimension_numbers<[1], [0], [0], [1], [0, 0, 1, 1], [], []>} : vector<64x16xf32>, vector<16x8xf32>, vector<64x8xf32> -> vector<64x8xf32>
    %9 = arith.addf %4, %8 : vector<64x8xf32>
    %10 = vector.extract_strided_slice %9 {offsets = [0, 0], sizes = [16, 8], strides = [1, 1]} : vector<64x8xf32> to vector<16x8xf32>
    %11 = arith.negf %10 : vector<16x8xf32>
    %12 = math.exp %11 : vector<16x8xf32>
    %cst_9 = arith.constant 1.000000e+00 : f32
    %13 = vector.broadcast %cst_9 : f32 to vector<16x8xf32>
    %14 = arith.addf %13, %12 : vector<16x8xf32>
    %15 = arith.divf %13, %14 : vector<16x8xf32>
    %16 = vector.extract_strided_slice %9 {offsets = [16, 0], sizes = [16, 8], strides = [1, 1]} : vector<64x8xf32> to vector<16x8xf32>
    %17 = arith.negf %16 : vector<16x8xf32>
    %18 = math.exp %17 : vector<16x8xf32>
    %cst_10 = arith.constant 1.000000e+00 : f32
    %19 = vector.broadcast %cst_10 : f32 to vector<16x8xf32>
    %20 = arith.addf %19, %18 : vector<16x8xf32>
    %21 = arith.divf %19, %20 : vector<16x8xf32>
    %22 = vector.extract_strided_slice %9 {offsets = [32, 0], sizes = [16, 8], strides = [1, 1]} : vector<64x8xf32> to vector<16x8xf32>
    %23 = math.tanh %22 : vector<16x8xf32>
    %24 = vector.extract_strided_slice %9 {offsets = [48, 0], sizes = [16, 8], strides = [1, 1]} : vector<64x8xf32> to vector<16x8xf32>
    %25 = arith.negf %24 : vector<16x8xf32>
    %26 = math.exp %25 : vector<16x8xf32>
    %cst_11 = arith.constant 1.000000e+00 : f32
    %27 = vector.broadcast %cst_11 : f32 to vector<16x8xf32>
    %28 = arith.addf %27, %26 : vector<16x8xf32>
    %29 = arith.divf %27, %28 : vector<16x8xf32>
    %c0_12 = arith.constant 0 : index
    %c0_13 = arith.constant 0 : index
    %30 = vector.load %arg7[%c0_12, %c0_13] : memref<16x8xf32, #tpu.memory_space<vmem>>, vector<16x8xf32>
    %31 = arith.mulf %21, %30 : vector<16x8xf32>
    %32 = arith.mulf %15, %23 : vector<16x8xf32>
    %33 = arith.addf %31, %32 : vector<16x8xf32>
    %34 = math.tanh %33 : vector<16x8xf32>
    %35 = arith.mulf %29, %34 : vector<16x8xf32>
    %c0_14 = arith.constant 0 : index
    %c0_15 = arith.constant 0 : index
    %36 = vector.load %arg7[%c0_14, %c0_15] : memref<16x8xf32, #tpu.memory_space<vmem>>, vector<16x8xf32>
    tpu.vector_store %arg7[%c0_14, %c0_15], %33 {strides = array<i32>} : memref<16x8xf32, #tpu.memory_space<vmem>>, vector<16x8xf32>,
    %c0_16 = arith.constant 0 : index
    %c0_17 = arith.constant 0 : index
    %37 = vector.load %arg6[%c0_16, %c0_17] : memref<16x8xf32, #tpu.memory_space<vmem>>, vector<16x8xf32>
    tpu.vector_store %arg6[%c0_16, %c0_17], %35 {strides = array<i32>} : memref<16x8xf32, #tpu.memory_space<vmem>>, vector<16x8xf32>,
    %c0_18 = arith.constant 0 : index
    %c0_19 = arith.constant 0 : index
    %c0_20 = arith.constant 0 : index
    %c0_21 = arith.constant 0 : index
    %38 = vector.load %arg5[%c0_18, %c0_19, %c0_20, %c0_21] : memref<1x1x16x8xf32, #tpu.memory_space<vmem>>, vector<1x1x16x8xf32>
    %39 = vector.shape_cast %38 : vector<1x1x16x8xf32> to vector<16x8xf32>
    %40 = vector.shape_cast %35 : vector<16x8xf32> to vector<1x1x16x8xf32>
    tpu.vector_store %arg5[%c0_18, %c0_19, %c0_20, %c0_21], %40 {strides = array<i32>} : memref<1x1x16x8xf32, #tpu.memory_space<vmem>>, vector<1x1x16x8xf32>,
    return
  }
  func.func @transform_0(%arg0: i32, %arg1: i32, %arg2: i32) -> (i32, i32, i32, i32) {
    %c2_i32 = arith.constant 2 : i32
    %0 = arith.muli %c2_i32, %arg2 : i32
    %c1_i32 = arith.constant 1 : i32
    %1 = arith.subi %c1_i32, %0 : i32
    %2 = arith.muli %arg1, %1 : i32
    %3 = arith.addi %arg2, %2 : i32
    %c0_i32 = arith.constant 0 : i32
    %c0_i32_0 = arith.constant 0 : i32
    return %arg1, %3, %c0_i32, %arg0 : i32, i32, i32, i32
  }
  func.func @transform_1(%arg0: i32, %arg1: i32, %arg2: i32) -> (i32, i32, i32) {
    %c0_i32 = arith.constant 0 : i32
    %c0_i32_0 = arith.constant 0 : i32
    %c0_i32_1 = arith.constant 0 : i32
    return %arg1, %c0_i32, %c0_i32_0 : i32, i32, i32
  }
  func.func @transform_2(%arg0: i32, %arg1: i32, %arg2: i32) -> (i32, i32, i32, i32) {
    %c2_i32 = arith.constant 2 : i32
    %0 = arith.muli %c2_i32, %arg2 : i32
    %c1_i32 = arith.constant 1 : i32
    %1 = arith.subi %c1_i32, %0 : i32
    %2 = arith.muli %arg1, %1 : i32
    %3 = arith.addi %arg2, %2 : i32
    %c0_i32 = arith.constant 0 : i32
    %c0_i32_0 = arith.constant 0 : i32
    return %3, %arg1, %c0_i32, %arg0 : i32, i32, i32, i32
  }
}

module attributes {stable_mosaic.version = 11 : i64} {
  func.func @_linear_kernel(%arg0: i32, %arg1: memref<2x128xf32, #tpu.memory_space<vmem>>, %arg2: memref<128x7xf32, #tpu.memory_space<vmem>>, %arg3: memref<1x7xf32, #tpu.memory_space<vmem>>, %arg4: memref<2x7xf32, #tpu.memory_space<vmem>>) attributes {dimension_semantics = [#tpu.dimension_semantics<arbitrary>], iteration_bounds = array<i64: 2>, scalar_prefetch = 0 : i64, scratch_operands = 0 : i64, tpu.core_type = #tpu.core_type<tc>, window_params = [{transform_indices = @transform_0, window_bounds = array<i64: 2, 128>}, {transform_indices = @transform_1, window_bounds = array<i64: 128, 7>}, {pipeline_mode = #tpu.pipeline_mode<synchronous>, transform_indices = @transform_2, window_bounds = array<i64: 1, 7>}, {pipeline_mode = #tpu.pipeline_mode<synchronous>, transform_indices = @transform_3, window_bounds = array<i64: 2, 7>}]} {
    %c0_i32 = arith.constant 0 : i32
    %0 = arith.cmpi eq, %arg0, %c0_i32 : i32
    %1 = arith.extui %0 : i1 to i32
    %c0_i32_0 = arith.constant 0 : i32
    %2 = arith.cmpi ne, %1, %c0_i32_0 : i32
    scf.if %2 {
      %c0_8 = arith.constant 0 : index
      %c0_9 = arith.constant 0 : index
      %9 = vector.load %arg3[%c0_8, %c0_9] : memref<1x7xf32, #tpu.memory_space<vmem>>, vector<1x7xf32>
      %10 = vector.shape_cast %9 : vector<1x7xf32> to vector<1x7xf32>
      %11 = vector.broadcast %10 : vector<1x7xf32> to vector<2x7xf32>
      %c0_10 = arith.constant 0 : index
      %c0_11 = arith.constant 0 : index
      %12 = vector.load %arg4[%c0_10, %c0_11] : memref<2x7xf32, #tpu.memory_space<vmem>>, vector<2x7xf32>
      tpu.vector_store %arg4[%c0_10, %c0_11], %11 {strides = array<i32>} : memref<2x7xf32, #tpu.memory_space<vmem>>, vector<2x7xf32>,
    } else {
    }
    %c0 = arith.constant 0 : index
    %c0_1 = arith.constant 0 : index
    %3 = vector.load %arg4[%c0, %c0_1] : memref<2x7xf32, #tpu.memory_space<vmem>>, vector<2x7xf32>
    %c0_2 = arith.constant 0 : index
    %c0_3 = arith.constant 0 : index
    %4 = vector.load %arg1[%c0_2, %c0_3] : memref<2x128xf32, #tpu.memory_space<vmem>>, vector<2x128xf32>
    %c0_4 = arith.constant 0 : index
    %c0_5 = arith.constant 0 : index
    %5 = vector.load %arg2[%c0_4, %c0_5] : memref<128x7xf32, #tpu.memory_space<vmem>>, vector<128x7xf32>
    %cst = arith.constant dense<0.000000e+00> : vector<2x7xf32>
    %6 = tpu.matmul %4, %5, %cst {dimension_numbers = #tpu.dot_dimension_numbers<[1], [0], [0], [1], [0, 0, 1, 1], [], []>} : vector<2x128xf32>, vector<128x7xf32>, vector<2x7xf32> -> vector<2x7xf32>
    %7 = arith.addf %3, %6 : vector<2x7xf32>
    %c0_6 = arith.constant 0 : index
    %c0_7 = arith.constant 0 : index
    %8 = vector.load %arg4[%c0_6, %c0_7] : memref<2x7xf32, #tpu.memory_space<vmem>>, vector<2x7xf32>
    tpu.vector_store %arg4[%c0_6, %c0_7], %7 {strides = array<i32>} : memref<2x7xf32, #tpu.memory_space<vmem>>, vector<2x7xf32>,
    return
  }
  func.func @transform_0(%arg0: i32) -> (i32, i32) {
    %c0_i32 = arith.constant 0 : i32
    %c0_i32_0 = arith.constant 0 : i32
    return %c0_i32, %arg0 : i32, i32
  }
  func.func @transform_1(%arg0: i32) -> (i32, i32) {
    %c0_i32 = arith.constant 0 : i32
    %c0_i32_0 = arith.constant 0 : i32
    return %arg0, %c0_i32 : i32, i32
  }
  func.func @transform_2(%arg0: i32) -> (i32, i32) {
    %c0_i32 = arith.constant 0 : i32
    %c0_i32_0 = arith.constant 0 : i32
    %c0_i32_1 = arith.constant 0 : i32
    return %c0_i32, %c0_i32_0 : i32, i32
  }
  func.func @transform_3(%arg0: i32) -> (i32, i32) {
    %c0_i32 = arith.constant 0 : i32
    %c0_i32_0 = arith.constant 0 : i32
    %c0_i32_1 = arith.constant 0 : i32
    return %c0_i32, %c0_i32_0 : i32, i32
  }
}

</mosaic_0001>

<llo_original>
// kernel: model_forward.4
$region0: #{model_forward.4}
  #allocation0 [shape = 'u32[]', space=smem, size = 0x4, offset = 0x4, fixed_abs, tag = 'smem constant byte address 0x4 - core index']
  #allocation1 [shape = 'u32[144,128]{1,0:T(1,128)}', space=vmem, size = 0x12000, scoped, tag = 'internal scratch']
  #allocation2 [shape = 'f32[16,8]{1,0:T(8,128)}', space=vmem, size = 0x2000, scoped, tag = 'scratch operand']
  #allocation3 [shape = 'f32[16,8]{1,0:T(8,128)}', space=vmem, size = 0x2000, scoped, tag = 'scratch operand']
  %s0 = inlined_call_operand.vmem [shape: f32[2,2,64,8], index: 0, kind: input, shape index: {}]
  %s1 = inlined_call_operand.vmem [shape: f32[2,64,16], index: 1, kind: input, shape index: {}]
  %s2 = inlined_call_operand.vmem [shape: f32[2,2,16,8], index: 2, kind: output, shape index: {}]
  %s3 = sld [smem:[#allocation0]]
  $region45: #{model_forward.4} parent=0
    _
  %s5 = ssub.s32 1, %s3
  %s6 = scalar_select 0, %s5, %s3
  loop: start=0, step=1, limit=6
  $region2: #{model_forward.4} parent=0 // loop_pre_header
    _
  $region3: #{model_forward.4} parent=0 // loop_header
    %s8 = sphi 0, %s12
    %p9 = scmp.ge.s32.totalorder %s8, 6
    %s15 = sphi 0, %s34
    %s16 = sphi 0, %s30
    %s17 = sphi 0, %s26
    %s18 = sphi 0, %s15
    %s19 = sphi 0, %s16
    %s20 = sphi 0, %s17
    %s21 = sphi 0, %s18
    %s22 = sphi 0, %s19
    %s23 = sphi 0, %s20
    %s49 = sphi 0, %s51
    %s52 = sphi 0, %s49
    %s53 = sphi 0, %s52
    %s69 = sphi 0, %s53
    %s75 = sphi 0, %s77
    %s78 = sphi 0, %s75
    %s79 = sphi 0, %s78
    %s95 = sphi 0, %s79
    %s113 = sphi 0, %s115
    %s116 = sphi 0, %s113
    %s117 = sphi 0, %s116
    %s133 = sphi 0, %s117
  $region4: #{model_forward.4} parent=0 // loop_header_branch
    %11 = sbr.rel (%p9) target = $region8
  $region5: #{model_forward.4} parent=0 // loop_body
    %s13 = ssub.s32 %s8, 1
    %s14 = ssub.s32 %s8, 2
    %s24 = sadd.s32 1, %s17
    %p25 = scmp.ge.s32.totalorder %s24, 2
    %s26 = scalar_select %p25, 0, %s24
    %s27 = sadd.s32 1, %s16
    %s28 = scalar_select %p25, %s27, %s16
    %p29 = scmp.ge.s32.totalorder %s28, 2
    %s30 = scalar_select %p29, 0, %s28
    %s31 = sadd.s32 1, %s15
    %s32 = scalar_select %p29, %s31, %s15
    %p33 = scmp.ge.s32.totalorder %s32, 1
    %s34 = scalar_select %p33, 0, %s32
    %s35 = smul.u32 %s17, 2
    %s36 = ssub.s32 1, %s35
    %s37 = smul.u32 %s16, %s36
    %s38 = sadd.s32 %s17, %s37
    %s39 = smul.u32 %s26, 2
    %s40 = ssub.s32 1, %s39
    %s41 = smul.u32 %s30, %s40
    %s42 = sadd.s32 %s26, %s41
    %s43 = ssub.s32 %s16, %s30
    %s44 = ssub.s32 %s38, %s42
    %s45 = sor.u32 %s43, %s44
    %s46 = ssub.s32 %s15, %s34
    %s47 = sor.u32 %s45, %s46
    %p48 = scmp.eq.s32.totalorder %s47, 0
    %s50 = sadd.s32 %s49, 1
    %s51 = scalar_select %p48, %s49, %s50
    %p54 = pneg %p48
    %p55 = scmp.eq.s32.totalorder %s8, 3
    %p56 = por %p54, %p55
    %p57 = scmp.ne.s32.totalorder %s49, %s52
    %p58 = scmp.eq.s32.totalorder %s8, 0
    %p59 = por %p57, %p58
    %p60 = scmp.ne.s32.totalorder %s49, %s52
    %p61 = scmp.eq.s32.totalorder %s13, 3
    %p62 = por %p60, %p61
    %p63 = scmp.ne.s32.totalorder %s52, %s53
    %p64 = scmp.eq.s32.totalorder %s13, 0
    %p65 = por %p63, %p64
    %p66 = scmp.ne.s32.totalorder %s52, %s53
    %p67 = scmp.eq.s32.totalorder %s14, 3
    %p68 = por %p66, %p67
    %p70 = scmp.ne.s32.totalorder %s53, %s69
    %p71 = scmp.eq.s32.totalorder %s14, 0
    %p72 = por %p70, %p71
    %s73 = ssub.s32 %s16, %s30
    %p74 = scmp.eq.s32.totalorder %s73, 0
    %s76 = sadd.s32 %s75, 1
    %s77 = scalar_select %p74, %s75, %s76
    %p80 = pneg %p74
    %p81 = scmp.eq.s32.totalorder %s8, 3
    %p82 = por %p80, %p81
    %p83 = scmp.ne.s32.totalorder %s75, %s78
    %p84 = scmp.eq.s32.totalorder %s8, 0
    %p85 = por %p83, %p84
    %p86 = scmp.ne.s32.totalorder %s75, %s78
    %p87 = scmp.eq.s32.totalorder %s13, 3
    %p88 = por %p86, %p87
    %p89 = scmp.ne.s32.totalorder %s78, %s79
    %p90 = scmp.eq.s32.totalorder %s13, 0
    %p91 = por %p89, %p90
    %p92 = scmp.ne.s32.totalorder %s78, %s79
    %p93 = scmp.eq.s32.totalorder %s14, 3
    %p94 = por %p92, %p93
    %p96 = scmp.ne.s32.totalorder %s79, %s95
    %p97 = scmp.eq.s32.totalorder %s14, 0
    %p98 = por %p96, %p97
    %s99 = smul.u32 %s17, 2
    %s100 = ssub.s32 1, %s99
    %s101 = smul.u32 %s16, %s100
    %s102 = sadd.s32 %s17, %s101
    %s103 = smul.u32 %s26, 2
    %s104 = ssub.s32 1, %s103
    %s105 = smul.u32 %s30, %s104
    %s106 = sadd.s32 %s26, %s105
    %s107 = ssub.s32 %s102, %s106
    %s108 = ssub.s32 %s16, %s30
    %s109 = sor.u32 %s107, %s108
    %s110 = ssub.s32 %s15, %s34
    %s111 = sor.u32 %s109, %s110
    %p112 = scmp.eq.s32.totalorder %s111, 0
    %s114 = sadd.s32 %s113, 1
    %s115 = scalar_select %p112, %s113, %s114
    %p118 = pneg %p112
    %p119 = scmp.eq.s32.totalorder %s8, 3
    %p120 = por %p118, %p119
    %p121 = scmp.ne.s32.totalorder %s113, %s116
    %p122 = scmp.eq.s32.totalorder %s8, 0
    %p123 = por %p121, %p122
    %p124 = scmp.ne.s32.totalorder %s113, %s116
    %p125 = scmp.eq.s32.totalorder %s13, 3
    %p126 = por %p124, %p125
    %p127 = scmp.ne.s32.totalorder %s116, %s117
    %p128 = scmp.eq.s32.totalorder %s13, 0
    %p129 = por %p127, %p128
    %p130 = scmp.ne.s32.totalorder %s116, %s117
    %p131 = scmp.eq.s32.totalorder %s14, 3
    %p132 = por %p130, %p131
    %p134 = scmp.ne.s32.totalorder %s117, %s133
    %p135 = scmp.eq.s32.totalorder %s14, 0
    %p136 = por %p134, %p135
    %p137 = scmp.le.s32.totalorder 1, %s8
    %p138 = scmp.lt.s32.totalorder %s8, 5
    %p139 = pnand %p137, %p138
    %p140 = pneg %p139
    // Predicated region
    $region9: #{model_forward.4} parent=5 // pred_check
      _
    $region10: #{model_forward.4} parent=5 // pred_check_branch
      %142 = sbr.rel (%p139) target = $region12
    $region11: #{model_forward.4} parent=5 // pred_region
      %s143 = ssub.s32 %s8, 1
    $region12: #{model_forward.4} parent=5 // pred_fallthru
      _
    %p144 = scmp.lt.s32.totalorder %s8, 4
    // Predicated region
    $region13: #{model_forward.4} parent=5 // pred_check
      %p145 = pneg %p144
    $region14: #{model_forward.4} parent=5 // pred_check_branch
      %147 = sbr.rel (%p145) target = $region16
    $region15: #{model_forward.4} parent=5 // pred_region
      // Predicated region
      $region17: #{model_forward.4} parent=15 // pred_check
        %p148 = pneg %p59
      $region18: #{model_forward.4} parent=15 // pred_check_branch
        %150 = sbr.rel (%p148) target = $region20
      $region19: #{model_forward.4} parent=15 // pred_region
        %s151 = smul.u32 %s17, 2
        %s152 = ssub.s32 1, %s151
        %s153 = smul.u32 %s16, %s152
        %s154 = sadd.s32 %s17, %s153
        %p155 = scmp.lt.s32.totalorder %s16, 1
        %s156 = scalar_select %p155, %s16, 1
        %p157 = scmp.lt.s32.totalorder %s154, 1
        %s158 = scalar_select %p157, %s154, 1
        %p159 = scmp.lt.s32.totalorder %s15, 0
        %s160 = scalar_select %p159, %s15, 0
        %s161 = smul.addr %s158, 8
        %s162 = sadd.s32 %s160, %s161
        %s163 = smul.addr %s156, 16
        %s164 = sadd.s32 %s162, %s163
        %s165 = smul.addr %s164, 8
        %s166 = scalar_lea.vmem %s0, %s165
        %s167 = smul.u32 %s17, 2
        %s168 = ssub.s32 1, %s167
        %s169 = smul.u32 %s16, %s168
        %s170 = sadd.s32 %s17, %s169
      $region20: #{model_forward.4} parent=15 // pred_fallthru
        _
      // Predicated region
      $region21: #{model_forward.4} parent=15 // pred_check
        %p171 = pneg %p85
      $region22: #{model_forward.4} parent=15 // pred_check_branch
        %173 = sbr.rel (%p171) target = $region24
      $region23: #{model_forward.4} parent=15 // pred_region
        %p174 = scmp.lt.s32.totalorder %s16, 1
        %s175 = scalar_select %p174, %s16, 1
        %s176 = smul.addr %s175, 8
        %s177 = smul.addr %s176, 8
        %s178 = scalar_lea.vmem %s1, %s177
      $region24: #{model_forward.4} parent=15 // pred_fallthru
        _
    $region16: #{model_forward.4} parent=5 // pred_fallthru
      _
    %p179 = scmp.le.s32.totalorder 1, %s8
    %p180 = scmp.lt.s32.totalorder %s8, 5
    %p181 = pnand %p179, %p180
    %p182 = pneg %p181
    // Predicated region
    $region25: #{model_forward.4} parent=5 // pred_check
      _
    $region26: #{model_forward.4} parent=5 // pred_check_branch
      %184 = sbr.rel (%p181) target = $region28
    $region27: #{model_forward.4} parent=5 // pred_region
      %s185 = ssub.s32 %s8, 1
      %s186 = smul.u32 %s20, 2
      %s187 = ssub.s32 1, %s186
      %s188 = smul.u32 %s19, %s187
      %s189 = sadd.s32 %s20, %s188
      %p190 = scmp.lt.s32.totalorder %s19, 1
      %s191 = scalar_select %p190, %s19, 1
      %p192 = scmp.lt.s32.totalorder %s189, 1
      %s193 = scalar_select %p192, %s189, 1
      %p194 = scmp.lt.s32.totalorder %s18, 0
      %s195 = scalar_select %p194, %s18, 0
      %s196 = smul.addr %s193, 8
      %s197 = sadd.s32 %s195, %s196
      %s198 = smul.addr %s191, 16
      %s199 = sadd.s32 %s197, %s198
      %s200 = smul.addr %s199, 8
      %s201 = scalar_lea.vmem %s0, %s200
      %p202 = pneg %p65
      %p203 = pneg %p62
      %p204 = scmp.lt.s32.totalorder %s19, 1
      %s205 = scalar_select %p204, %s19, 1
      %s206 = smul.addr %s205, 8
      %s207 = smul.addr %s206, 8
      %s208 = scalar_lea.vmem %s1, %s207
      %p209 = pneg %p91
      %p210 = pneg %p88
      %p211 = pneg %p129
      %p212 = pneg %p126
      %s213 = smul.u32 %s20, 2
      %s214 = ssub.s32 1, %s213
      %s215 = smul.u32 %s19, %s214
      %s216 = sadd.s32 %s20, %s215
      %p217 = scmp.lt.s32.totalorder %s216, 1
      %s218 = scalar_select %p217, %s216, 1
      %p219 = scmp.lt.s32.totalorder %s19, 1
      %s220 = scalar_select %p219, %s19, 1
      %p221 = scmp.lt.s32.totalorder %s18, 0
      %s222 = scalar_select %p221, %s18, 0
      %s223 = smul.addr %s220, 2
      %s224 = sadd.s32 %s222, %s223
      %s225 = smul.addr %s218, 4
      %s226 = sadd.s32 %s224, %s225
      %s227 = smul.addr %s226, 8
      %s228 = scalar_lea.vmem %s2, %s227
      %s229 = smul.u32 %s20, 2
      %s230 = ssub.s32 1, %s229
      %s231 = smul.u32 %s19, %s230
      %s232 = sadd.s32 %s20, %s231
      %p233 = scmp.lt.s32.totalorder %s19, 1
      %s234 = scalar_select %p233, %s19, 1
      %p235 = scmp.lt.s32.totalorder %s232, 1
      %s236 = scalar_select %p235, %s232, 1
      %p237 = scmp.lt.s32.totalorder %s18, 0
      %s238 = scalar_select %p237, %s18, 0
      %s239 = smul.addr %s236, 8
      %s240 = sadd.s32 %s238, %s239
      %s241 = smul.addr %s234, 16
      %s242 = sadd.s32 %s240, %s241
      %s243 = smul.addr %s242, 8
      %s244 = scalar_lea.vmem %s0, %s243
      %s245 = smul.u32 %s20, 2
      %s246 = ssub.s32 1, %s245
      %s247 = smul.u32 %s19, %s246
      %s248 = sadd.s32 %s20, %s247
      %p249 = scmp.lt.s32.totalorder %s19, 1
      %s250 = scalar_select %p249, %s19, 1
      %s251 = smul.addr %s250, 8
      %s252 = smul.addr %s251, 8
      %s253 = scalar_lea.vmem %s1, %s252
      %s254 = smul.u32 %s20, 2
      %s255 = ssub.s32 1, %s254
      %s256 = smul.u32 %s19, %s255
      %s257 = sadd.s32 %s20, %s256
      %p258 = scmp.lt.s32.totalorder %s257, 1
      %s259 = scalar_select %p258, %s257, 1
      %p260 = scmp.lt.s32.totalorder %s19, 1
      %s261 = scalar_select %p260, %s19, 1
      %p262 = scmp.lt.s32.totalorder %s18, 0
      %s263 = scalar_select %p262, %s18, 0
      %s264 = smul.addr %s261, 2
      %s265 = sadd.s32 %s263, %s264
      %s266 = smul.addr %s259, 4
      %s267 = sadd.s32 %s265, %s266
      %s268 = smul.addr %s267, 8
      %s269 = scalar_lea.vmem %s2, %s268
      %s270 = smul.u32 %s20, 2
      %s271 = ssub.s32 1, %s270
      %s272 = smul.u32 %s19, %s271
      %s273 = sadd.s32 %s20, %s272
      %p274 = scmp.eq.s32.totalorder %s20, 0
      // Predicated region
      $region29: #{model_forward.4} parent=27 // pred_check
        %p275 = pneg %p274
      $region30: #{model_forward.4} parent=27 // pred_check_branch
        %277 = sbr.rel (%p275) target = $region32
      $region31: #{model_forward.4} parent=27 // pred_region
        %vm278 = vcmask 64512
        %279 = vst.msk [vmem:[#allocation2] sm:$0xff] %vm278, 0.0
        %280 = vst.msk [vmem:[#allocation2 + $0x8] sm:$0xff] %vm278, 0.0
        %281 = vst.msk [vmem:[#allocation3] sm:$0xff] %vm278, 0.0
        %282 = vst.msk [vmem:[#allocation3 + $0x8] sm:$0xff] %vm278, 0.0
      $region32: #{model_forward.4} parent=27 // pred_fallthru
        _
      %v283 = vld [vmem:[%s244] sm:$0xff]
      %v284 = vld [vmem:[%s244 + $0x8] sm:$0xff]
      %v285 = vld [vmem:[%s244 + $0x10] sm:$0xff]
      %v286 = vld [vmem:[%s244 + $0x18] sm:$0xff]
      %v287 = vld [vmem:[%s244 + $0x20] sm:$0xff]
      %v288 = vld [vmem:[%s244 + $0x28] sm:$0xff]
      %v289 = vld [vmem:[%s244 + $0x30] sm:$0xff]
      %v290 = vld [vmem:[%s244 + $0x38] sm:$0xff]
      %v291 = vld [vmem:[%s253] sm:$0xff]
      %v292 = vld [vmem:[%s253 + $0x8] sm:$0xff]
      %v293 = vld [vmem:[%s253 + $0x10] sm:$0xff]
      %v294 = vld [vmem:[%s253 + $0x18] sm:$0xff]
      %v295 = vld [vmem:[%s253 + $0x20] sm:$0xff]
      %v296 = vld [vmem:[%s253 + $0x28] sm:$0xff]
      %v297 = vld [vmem:[%s253 + $0x30] sm:$0xff]
      %v298 = vld [vmem:[%s253 + $0x38] sm:$0xff]
      %v299 = vld [vmem:[#allocation2] sm:$0xff]
      %v300 = vld [vmem:[#allocation2 + $0x8] sm:$0xff]
      %vm301 = vcmask 130048
      %v303 = vsel %vm301, %v291, 0
      %v306 = vsel %vm301, %v292, 0
      %v309 = vsel %vm301, %v293, 0
      %v312 = vsel %vm301, %v294, 0
      %v315 = vsel %vm301, %v295, 0
      %v318 = vsel %vm301, %v296, 0
      %v321 = vsel %vm301, %v297, 0
      %v324 = vsel %vm301, %v298, 0
      %326 = vmatprep.subr.mxu0 0.0
      %327 = vmatpush1.msra.mxu0 %v299
      %328 = vmatprep.subr.mxu0 0.0
      %329 = vmatpush1.msra.mxu0 %v300
      %330 = vmatprep.subr.mxu0 0.0
      %331 = vmatpush1.msra.mxu0 0.0
      %332 = vmatprep.subr.mxu0 0.0
      %333 = vmatpush1.msra.mxu0 0.0
      %334 = vmatprep.subr.mxu0 0.0
      %335 = vmatpush1.msra.mxu0 0.0
      %336 = vmatprep.subr.mxu0 0.0
      %337 = vmatpush1.msra.mxu0 0.0
      %338 = vmatprep.subr.mxu0 0.0
      %339 = vmatpush1.msra.mxu0 0.0
      %340 = vmatprep.subr.mxu0 0.0
      %341 = vmatpush1.msra.mxu0 0.0
      %342 = vmatprep.subr.mxu0 0.0
      %343 = vmatpush1.msra.mxu0 0.0
      %344 = vmatprep.subr.mxu0 0.0
      %345 = vmatpush1.msra.mxu0 0.0
      %346 = vmatprep.subr.mxu0 0.0
      %347 = vmatpush1.msra.mxu0 0.0
      %348 = vmatprep.subr.mxu0 0.0
      %349 = vmatpush1.msra.mxu0 0.0
      %350 = vmatprep.subr.mxu0 0.0
      %351 = vmatpush1.msra.mxu0 0.0
      %352 = vmatprep.subr.mxu0 0.0
      %353 = vmatpush1.msra.mxu0 0.0
      %354 = vmatprep.subr.mxu0 0.0
      %355 = vmatpush1.msra.mxu0 0.0
      %356 = vmatprep.subr.mxu0 0.0
      %357 = vmatpush1.msra.mxu0 0.0
      %358 = vmatprep.subr.mxu0 0.0
      %359 = vmatpush1.msra.mxu0 0.0
      %360 = vmatprep.subr.mxu0 0.0
      %361 = vmatpush1.msra.mxu0 0.0
      %362 = vmatprep.subr.mxu0 0.0
      %363 = vmatpush1.msra.mxu0 0.0
      %364 = vmatprep.subr.mxu0 0.0
      %365 = vmatpush1.msra.mxu0 0.0
      %366 = vmatprep.subr.mxu0 0.0
      %367 = vmatpush1.msra.mxu0 0.0
      %368 = vmatprep.subr.mxu0 0.0
      %369 = vmatpush1.msra.mxu0 0.0
      %370 = vmatprep.subr.mxu0 0.0
      %371 = vmatpush1.msra.mxu0 0.0
      %372 = vmatprep.subr.mxu0 0.0
      %373 = vmatpush1.msra.mxu0 0.0
      %374 = vmatprep.subr.mxu0 0.0
      %375 = vmatpush1.msra.mxu0 0.0
      %376 = vmatprep.subr.mxu0 0.0
      %377 = vmatpush1.msra.mxu0 0.0
      %378 = vmatprep.subr.mxu0 0.0
      %379 = vmatpush1.msra.mxu0 0.0
      %380 = vmatprep.subr.mxu0 0.0
      %381 = vmatpush1.msra.mxu0 0.0
      %382 = vmatprep.subr.mxu0 0.0
      %383 = vmatpush1.msra.mxu0 0.0
      %384 = vmatprep.subr.mxu0 0.0
      %385 = vmatpush1.msra.mxu0 0.0
      %386 = vmatprep.subr.mxu0 0.0
      %387 = vmatpush1.msra.mxu0 0.0
      %388 = vmatprep.subr.mxu0 0.0
      %389 = vmatpush1.msra.mxu0 0.0
      %390 = vmatprep.mubr.f32.mxu0 0.0
      %391 = vmatmul.mubr.f32.gmra.mrb[0].mxu0 %v303
      %v392 = vpop.f32.mrb[0].mxu0
      %v393 = vadd.f32 0.0, %v392
      %v394 = vpop.f32.mrb[0].mxu0
      %395 = vmatprep.mubr.f32.mxu0 0.0
      %396 = vmatmul.mubr.f32.gmra.mrb[0].mxu0 %v306
      %v397 = vpop.f32.mrb[0].mxu0
      %v398 = vadd.f32 0.0, %v397
      %v399 = vpop.f32.mrb[0].mxu0
      %400 = vmatprep.mubr.f32.mxu0 0.0
      %401 = vmatmul.mubr.f32.gmra.mrb[0].mxu0 %v309
      %v402 = vpop.f32.mrb[0].mxu0
      %v403 = vadd.f32 0.0, %v402
      %v404 = vpop.f32.mrb[0].mxu0
      %405 = vmatprep.mubr.f32.mxu0 0.0
      %406 = vmatmul.mubr.f32.gmra.mrb[0].mxu0 %v312
      %v407 = vpop.f32.mrb[0].mxu0
      %v408 = vadd.f32 0.0, %v407
      %v409 = vpop.f32.mrb[0].mxu0
      %410 = vmatprep.mubr.f32.mxu0 0.0
      %411 = vmatmul.mubr.f32.gmra.mrb[0].mxu0 %v315
      %v412 = vpop.f32.mrb[0].mxu0
      %v413 = vadd.f32 0.0, %v412
      %v414 = vpop.f32.mrb[0].mxu0
      %415 = vmatprep.mubr.f32.mxu0 0.0
      %416 = vmatmul.mubr.f32.gmra.mrb[0].mxu0 %v318
      %v417 = vpop.f32.mrb[0].mxu0
      %v418 = vadd.f32 0.0, %v417
      %v419 = vpop.f32.mrb[0].mxu0
      %420 = vmatprep.mubr.f32.mxu0 0.0
      %421 = vmatmul.mubr.f32.gmra.mrb[0].mxu0 %v321
      %v422 = vpop.f32.mrb[0].mxu0
      %v423 = vadd.f32 0.0, %v422
      %v424 = vpop.f32.mrb[0].mxu0
      %425 = vmatprep.mubr.f32.mxu0 0.0
      %426 = vmatmul.mubr.f32.gmra.mrb[0].mxu0 %v324
      %v427 = vpop.f32.mrb[0].mxu0
      %v428 = vadd.f32 0.0, %v427
      %v429 = vpop.f32.mrb[0].mxu0
      %430 = vdwg.mxu0
      %v431 = vadd.f32 %v283, %v393
      %v432 = vadd.f32 %v284, %v398
      %v433 = vadd.f32 %v285, %v403
      %v434 = vadd.f32 %v286, %v408
      %v435 = vadd.f32 %v287, %v413
      %v436 = vadd.f32 %v288, %v418
      %v437 = vadd.f32 %v289, %v423
      %v438 = vadd.f32 %v290, %v428
      %v439 = vxor.u32 %v431, 2147483648
      %v440 = vxor.u32 %v432, 2147483648
      %v441 = vmul.f32 %v439, 1.442695
      %v442 = vpow.pop %v441
      %v443 = vmul.f32 %v440, 1.442695
      %v444 = vpow.pop %v443
      %v445 = vadd.f32 %v442, 1.0
      %v446 = vadd.f32 %v444, 1.0
      %v447 = vrcp.pop %v445
      %v448 = vmul.f32 1.0, %v447
      %v449 = vrcp.pop %v446
      %v450 = vmul.f32 1.0, %v449
      %v451 = vxor.u32 %v433, 2147483648
      %v452 = vxor.u32 %v434, 2147483648
      %v453 = vmul.f32 %v451, 1.442695
      %v454 = vpow.pop %v453
      %v455 = vmul.f32 %v452, 1.442695
      %v456 = vpow.pop %v455
      %v457 = vadd.f32 %v454, 1.0
      %v458 = vadd.f32 %v456, 1.0
      %v459 = vrcp.pop %v457
      %v460 = vmul.f32 1.0, %v459
      %v461 = vrcp.pop %v458
      %v462 = vmul.f32 1.0, %v461
      %v463 = vtanh.pop %v435
      %v464 = vtanh.pop %v436
      %v465 = vxor.u32 %v437, 2147483648
      %v466 = vxor.u32 %v438, 2147483648
      %v467 = vmul.f32 %v465, 1.442695
      %v468 = vpow.pop %v467
      %v469 = vmul.f32 %v466, 1.442695
      %v470 = vpow.pop %v469
      %v471 = vadd.f32 %v468, 1.0
      %v472 = vadd.f32 %v470, 1.0
      %v473 = vrcp.pop %v471
      %v474 = vmul.f32 1.0, %v473
      %v475 = vrcp.pop %v472
      %v476 = vmul.f32 1.0, %v475
      %v477 = vld [vmem:[#allocation3] sm:$0xff]
      %v478 = vld [vmem:[#allocation3 + $0x8] sm:$0xff]
      %v479 = vmul.f32 %v460, %v477
      %v480 = vmul.f32 %v462, %v478
      %v481 = vmul.f32 %v448, %v463
      %v482 = vmul.f32 %v450, %v464
      %v483 = vadd.f32 %v479, %v481
      %v484 = vadd.f32 %v480, %v482
      %v485 = vtanh.pop %v483
      %v486 = vtanh.pop %v484
      %v487 = vmul.f32 %v474, %v485
      %v488 = vmul.f32 %v476, %v486
      %vm489 = vcmask 64512
      %490 = vst.msk [vmem:[#allocation3] sm:$0xff] %vm489, %v483
      %491 = vst.msk [vmem:[#allocation3 + $0x8] sm:$0xff] %vm489, %v484
      %492 = vst.msk [vmem:[#allocation2] sm:$0xff] %vm489, %v487
      %493 = vst.msk [vmem:[#allocation2 + $0x8] sm:$0xff] %vm489, %v488
      %494 = vst.msk [vmem:[%s269] sm:$0xff] %vm489, %v487
      %495 = vst.msk [vmem:[%s269 + $0x8] sm:$0xff] %vm489, %v488
      %s496 = smul.u32 %s20, 2
      %s497 = ssub.s32 1, %s496
      %s498 = smul.u32 %s19, %s497
      %s499 = sadd.s32 %s20, %s498
      %p500 = scmp.lt.s32.totalorder %s499, 1
      %s501 = scalar_select %p500, %s499, 1
      %p502 = scmp.lt.s32.totalorder %s19, 1
      %s503 = scalar_select %p502, %s19, 1
      %p504 = scmp.lt.s32.totalorder %s18, 0
      %s505 = scalar_select %p504, %s18, 0
      %s506 = smul.addr %s503, 2
      %s507 = sadd.s32 %s505, %s506
      %s508 = smul.addr %s501, 4
      %s509 = sadd.s32 %s507, %s508
      %s510 = smul.addr %s509, 8
      %s511 = scalar_lea.vmem %s2, %s510
      // Predicated region
      $region33: #{model_forward.4} parent=27 // pred_check
        %p512 = pneg %p126
      $region34: #{model_forward.4} parent=27 // pred_check_branch
        %514 = sbr.rel (%p512) target = $region36
      $region35: #{model_forward.4} parent=27 // pred_region
        %s515 = smul.u32 %s20, 2
        %s516 = ssub.s32 1, %s515
        %s517 = smul.u32 %s19, %s516
        %s518 = sadd.s32 %s20, %s517
      $region36: #{model_forward.4} parent=27 // pred_fallthru
        _
    $region28: #{model_forward.4} parent=5 // pred_fallthru
      _
    %p519 = scmp.le.s32.totalorder 2, %s8
    // Predicated region
    $region37: #{model_forward.4} parent=5 // pred_check
      %p520 = pneg %p519
    $region38: #{model_forward.4} parent=5 // pred_check_branch
      %522 = sbr.rel (%p520) target = $region40
    $region39: #{model_forward.4} parent=5 // pred_region
      %s523 = ssub.s32 %s8, 2
      // Predicated region
      $region41: #{model_forward.4} parent=39 // pred_check
        %p524 = pneg %p132
      $region42: #{model_forward.4} parent=39 // pred_check_branch
        %526 = sbr.rel (%p524) target = $region44
      $region43: #{model_forward.4} parent=39 // pred_region
        %s527 = smul.u32 %s23, 2
        %s528 = ssub.s32 1, %s527
        %s529 = smul.u32 %s22, %s528
        %s530 = sadd.s32 %s23, %s529
        %p531 = scmp.lt.s32.totalorder %s530, 1
        %s532 = scalar_select %p531, %s530, 1
        %p533 = scmp.lt.s32.totalorder %s22, 1
        %s534 = scalar_select %p533, %s22, 1
        %p535 = scmp.lt.s32.totalorder %s21, 0
        %s536 = scalar_select %p535, %s21, 0
        %s537 = smul.addr %s534, 2
        %s538 = sadd.s32 %s536, %s537
        %s539 = smul.addr %s532, 4
        %s540 = sadd.s32 %s538, %s539
        %s541 = smul.addr %s540, 8
        %s542 = scalar_lea.vmem %s2, %s541
      $region44: #{model_forward.4} parent=39 // pred_fallthru
        _
    $region40: #{model_forward.4} parent=5 // pred_fallthru
      _
  $region6: #{model_forward.4} parent=0 // loop_footer
    %s12 = sadd.s32 1, %s8
  $region7: #{model_forward.4} parent=0 // loop_footer_branch
    %7 = sbr.rel target = $region3
  $region8: #{model_forward.4} parent=0 // loop_exit
    _

// kernel: model_forward.3
$region0: #{model_forward.3}
  #allocation0 [shape = 'u32[]', space=smem, size = 0x4, offset = 0x4, fixed_abs, tag = 'smem constant byte address 0x4 - core index']
  #allocation1 [shape = 'u32[144,128]{1,0:T(1,128)}', space=vmem, size = 0x12000, scoped, tag = 'internal scratch']
  %s0 = inlined_call_operand.vmem [shape: f32[2,16,8], index: 0, kind: input, shape index: {}]
  %s1 = inlined_call_operand.vmem [shape: f32[2,64,16], index: 1, kind: input, shape index: {}]
  %s2 = inlined_call_operand.vmem [shape: f32[2,64,1], index: 2, kind: input, shape index: {}]
  %s3 = inlined_call_operand.vmem [shape: f32[2,2,64,8], index: 3, kind: output, shape index: {}]
  %s4 = sld [smem:[#allocation0]]
  $region45: #{model_forward.3} parent=0
    _
  %s6 = ssub.s32 1, %s4
  %s7 = scalar_select 0, %s6, %s4
  loop: start=0, step=1, limit=6
  $region2: #{model_forward.3} parent=0 // loop_pre_header
    _
  $region3: #{model_forward.3} parent=0 // loop_header
    %s9 = sphi 0, %s13
    %p10 = scmp.ge.s32.totalorder %s9, 6
    %s16 = sphi 0, %s28
    %s17 = sphi 0, %s24
    %s18 = sphi 0, %s16
    %s19 = sphi 0, %s17
    %s20 = sphi 0, %s18
    %s21 = sphi 0, %s19
    %s31 = sphi 0, %s33
    %s34 = sphi 0, %s31
    %s35 = sphi 0, %s34
    %s51 = sphi 0, %s35
    %s57 = sphi 0, %s59
    %s60 = sphi 0, %s57
    %s61 = sphi 0, %s60
    %s77 = sphi 0, %s61
    %s83 = sphi 0, %s85
    %s86 = sphi 0, %s83
    %s87 = sphi 0, %s86
    %s103 = sphi 0, %s87
    %s111 = sphi 0, %s113
    %s114 = sphi 0, %s111
    %s115 = sphi 0, %s114
    %s131 = sphi 0, %s115
  $region4: #{model_forward.3} parent=0 // loop_header_branch
    %12 = sbr.rel (%p10) target = $region8
  $region5: #{model_forward.3} parent=0 // loop_body
    %s14 = ssub.s32 %s9, 1
    %s15 = ssub.s32 %s9, 2
    %s22 = sadd.s32 1, %s17
    %p23 = scmp.ge.s32.totalorder %s22, 2
    %s24 = scalar_select %p23, 0, %s22
    %s25 = sadd.s32 1, %s16
    %s26 = scalar_select %p23, %s25, %s16
    %p27 = scmp.ge.s32.totalorder %s26, 2
    %s28 = scalar_select %p27, 0, %s26
    %s29 = ssub.s32 %s17, %s24
    %p30 = scmp.eq.s32.totalorder %s29, 0
    %s32 = sadd.s32 %s31, 1
    %s33 = scalar_select %p30, %s31, %s32
    %p36 = pneg %p30
    %p37 = scmp.eq.s32.totalorder %s9, 3
    %p38 = por %p36, %p37
    %p39 = scmp.ne.s32.totalorder %s31, %s34
    %p40 = scmp.eq.s32.totalorder %s9, 0
    %p41 = por %p39, %p40
    %p42 = scmp.ne.s32.totalorder %s31, %s34
    %p43 = scmp.eq.s32.totalorder %s14, 3
    %p44 = por %p42, %p43
    %p45 = scmp.ne.s32.totalorder %s34, %s35
    %p46 = scmp.eq.s32.totalorder %s14, 0
    %p47 = por %p45, %p46
    %p48 = scmp.ne.s32.totalorder %s34, %s35
    %p49 = scmp.eq.s32.totalorder %s15, 3
    %p50 = por %p48, %p49
    %p52 = scmp.ne.s32.totalorder %s35, %s51
    %p53 = scmp.eq.s32.totalorder %s15, 0
    %p54 = por %p52, %p53
    %s55 = ssub.s32 %s16, %s28
    %p56 = scmp.eq.s32.totalorder %s55, 0
    %s58 = sadd.s32 %s57, 1
    %s59 = scalar_select %p56, %s57, %s58
    %p62 = pneg %p56
    %p63 = scmp.eq.s32.totalorder %s9, 3
    %p64 = por %p62, %p63
    %p65 = scmp.ne.s32.totalorder %s57, %s60
    %p66 = scmp.eq.s32.totalorder %s9, 0
    %p67 = por %p65, %p66
    %p68 = scmp.ne.s32.totalorder %s57, %s60
    %p69 = scmp.eq.s32.totalorder %s14, 3
    %p70 = por %p68, %p69
    %p71 = scmp.ne.s32.totalorder %s60, %s61
    %p72 = scmp.eq.s32.totalorder %s14, 0
    %p73 = por %p71, %p72
    %p74 = scmp.ne.s32.totalorder %s60, %s61
    %p75 = scmp.eq.s32.totalorder %s15, 3
    %p76 = por %p74, %p75
    %p78 = scmp.ne.s32.totalorder %s61, %s77
    %p79 = scmp.eq.s32.totalorder %s15, 0
    %p80 = por %p78, %p79
    %s81 = ssub.s32 %s16, %s28
    %p82 = scmp.eq.s32.totalorder %s81, 0
    %s84 = sadd.s32 %s83, 1
    %s85 = scalar_select %p82, %s83, %s84
    %p88 = pneg %p82
    %p89 = scmp.eq.s32.totalorder %s9, 3
    %p90 = por %p88, %p89
    %p91 = scmp.ne.s32.totalorder %s83, %s86
    %p92 = scmp.eq.s32.totalorder %s9, 0
    %p93 = por %p91, %p92
    %p94 = scmp.ne.s32.totalorder %s83, %s86
    %p95 = scmp.eq.s32.totalorder %s14, 3
    %p96 = por %p94, %p95
    %p97 = scmp.ne.s32.totalorder %s86, %s87
    %p98 = scmp.eq.s32.totalorder %s14, 0
    %p99 = por %p97, %p98
    %p100 = scmp.ne.s32.totalorder %s86, %s87
    %p101 = scmp.eq.s32.totalorder %s15, 3
    %p102 = por %p100, %p101
    %p104 = scmp.ne.s32.totalorder %s87, %s103
    %p105 = scmp.eq.s32.totalorder %s15, 0
    %p106 = por %p104, %p105
    %s107 = ssub.s32 %s16, %s28
    %s108 = ssub.s32 %s17, %s24
    %s109 = sor.u32 %s107, %s108
    %p110 = scmp.eq.s32.totalorder %s109, 0
    %s112 = sadd.s32 %s111, 1
    %s113 = scalar_select %p110, %s111, %s112
    %p116 = pneg %p110
    %p117 = scmp.eq.s32.totalorder %s9, 3
    %p118 = por %p116, %p117
    %p119 = scmp.ne.s32.totalorder %s111, %s114
    %p120 = scmp.eq.s32.totalorder %s9, 0
    %p121 = por %p119, %p120
    %p122 = scmp.ne.s32.totalorder %s111, %s114
    %p123 = scmp.eq.s32.totalorder %s14, 3
    %p124 = por %p122, %p123
    %p125 = scmp.ne.s32.totalorder %s114, %s115
    %p126 = scmp.eq.s32.totalorder %s14, 0
    %p127 = por %p125, %p126
    %p128 = scmp.ne.s32.totalorder %s114, %s115
    %p129 = scmp.eq.s32.totalorder %s15, 3
    %p130 = por %p128, %p129
    %p132 = scmp.ne.s32.totalorder %s115, %s131
    %p133 = scmp.eq.s32.totalorder %s15, 0
    %p134 = por %p132, %p133
    %p135 = scmp.le.s32.totalorder 1, %s9
    %p136 = scmp.lt.s32.totalorder %s9, 5
    %p137 = pnand %p135, %p136
    %p138 = pneg %p137
    // Predicated region
    $region9: #{model_forward.3} parent=5 // pred_check
      _
    $region10: #{model_forward.3} parent=5 // pred_check_branch
      %140 = sbr.rel (%p137) target = $region12
    $region11: #{model_forward.3} parent=5 // pred_region
      %s141 = ssub.s32 %s9, 1
    $region12: #{model_forward.3} parent=5 // pred_fallthru
      _
    %p142 = scmp.lt.s32.totalorder %s9, 4
    // Predicated region
    $region13: #{model_forward.3} parent=5 // pred_check
      %p143 = pneg %p142
    $region14: #{model_forward.3} parent=5 // pred_check_branch
      %145 = sbr.rel (%p143) target = $region16
    $region15: #{model_forward.3} parent=5 // pred_region
      // Predicated region
      $region17: #{model_forward.3} parent=15 // pred_check
        %p146 = pneg %p41
      $region18: #{model_forward.3} parent=15 // pred_check_branch
        %148 = sbr.rel (%p146) target = $region20
      $region19: #{model_forward.3} parent=15 // pred_region
        %p149 = scmp.lt.s32.totalorder %s17, 1
        %s150 = scalar_select %p149, %s17, 1
        %s151 = smul.addr %s150, 2
        %s152 = smul.addr %s151, 8
        %s153 = scalar_lea.vmem %s0, %s152
      $region20: #{model_forward.3} parent=15 // pred_fallthru
        _
      // Predicated region
      $region21: #{model_forward.3} parent=15 // pred_check
        %p154 = pneg %p67
      $region22: #{model_forward.3} parent=15 // pred_check_branch
        %156 = sbr.rel (%p154) target = $region24
      $region23: #{model_forward.3} parent=15 // pred_region
        %p157 = scmp.lt.s32.totalorder %s16, 1
        %s158 = scalar_select %p157, %s16, 1
        %s159 = smul.addr %s158, 8
        %s160 = smul.addr %s159, 8
        %s161 = scalar_lea.vmem %s1, %s160
      $region24: #{model_forward.3} parent=15 // pred_fallthru
        _
      // Predicated region
      $region25: #{model_forward.3} parent=15 // pred_check
        %p162 = pneg %p93
      $region26: #{model_forward.3} parent=15 // pred_check_branch
        %164 = sbr.rel (%p162) target = $region28
      $region27: #{model_forward.3} parent=15 // pred_region
        %p165 = scmp.lt.s32.totalorder %s16, 1
        %s166 = scalar_select %p165, %s16, 1
        %s167 = smul.addr %s166, 8
        %s168 = smul.addr %s167, 8
        %s169 = scalar_lea.vmem %s2, %s168
      $region28: #{model_forward.3} parent=15 // pred_fallthru
        _
    $region16: #{model_forward.3} parent=5 // pred_fallthru
      _
    %p170 = scmp.le.s32.totalorder 1, %s9
    %p171 = scmp.lt.s32.totalorder %s9, 5
    %p172 = pnand %p170, %p171
    %p173 = pneg %p172
    // Predicated region
    $region29: #{model_forward.3} parent=5 // pred_check
      _
    $region30: #{model_forward.3} parent=5 // pred_check_branch
      %175 = sbr.rel (%p172) target = $region32
    $region31: #{model_forward.3} parent=5 // pred_region
      %s176 = ssub.s32 %s9, 1
      %p177 = scmp.lt.s32.totalorder %s19, 1
      %s178 = scalar_select %p177, %s19, 1
      %s179 = smul.addr %s178, 2
      %s180 = smul.addr %s179, 8
      %s181 = scalar_lea.vmem %s0, %s180
      %p182 = pneg %p47
      %p183 = pneg %p44
      %p184 = scmp.lt.s32.totalorder %s18, 1
      %s185 = scalar_select %p184, %s18, 1
      %s186 = smul.addr %s185, 8
      %s187 = smul.addr %s186, 8
      %s188 = scalar_lea.vmem %s1, %s187
      %p189 = pneg %p73
      %p190 = pneg %p70
      %p191 = scmp.lt.s32.totalorder %s18, 1
      %s192 = scalar_select %p191, %s18, 1
      %s193 = smul.addr %s192, 8
      %s194 = smul.addr %s193, 8
      %s195 = scalar_lea.vmem %s2, %s194
      %p196 = pneg %p99
      %p197 = pneg %p96
      %p198 = pneg %p127
      %p199 = pneg %p124
      %p200 = scmp.lt.s32.totalorder %s18, 1
      %s201 = scalar_select %p200, %s18, 1
      %p202 = scmp.lt.s32.totalorder %s19, 1
      %s203 = scalar_select %p202, %s19, 1
      %s204 = smul.addr %s203, 8
      %s205 = smul.addr %s201, 16
      %s206 = sadd.s32 %s204, %s205
      %s207 = smul.addr %s206, 8
      %s208 = scalar_lea.vmem %s3, %s207
      %p209 = scmp.lt.s32.totalorder %s19, 1
      %s210 = scalar_select %p209, %s19, 1
      %s211 = smul.addr %s210, 2
      %s212 = smul.addr %s211, 8
      %s213 = scalar_lea.vmem %s0, %s212
      %p214 = scmp.lt.s32.totalorder %s18, 1
      %s215 = scalar_select %p214, %s18, 1
      %s216 = smul.addr %s215, 8
      %s217 = smul.addr %s216, 8
      %s218 = scalar_lea.vmem %s1, %s217
      %p219 = scmp.lt.s32.totalorder %s18, 1
      %s220 = scalar_select %p219, %s18, 1
      %s221 = smul.addr %s220, 8
      %s222 = smul.addr %s221, 8
      %s223 = scalar_lea.vmem %s2, %s222
      %p224 = scmp.lt.s32.totalorder %s18, 1
      %s225 = scalar_select %p224, %s18, 1
      %p226 = scmp.lt.s32.totalorder %s19, 1
      %s227 = scalar_select %p226, %s19, 1
      %s228 = smul.addr %s227, 8
      %s229 = smul.addr %s225, 16
      %s230 = sadd.s32 %s228, %s229
      %s231 = smul.addr %s230, 8
      %s232 = scalar_lea.vmem %s3, %s231
      %v233 = vld [vmem:[%s218] sm:$0xff]
      %v234 = vld [vmem:[%s218 + $0x8] sm:$0xff]
      %v235 = vld [vmem:[%s218 + $0x10] sm:$0xff]
      %v236 = vld [vmem:[%s218 + $0x18] sm:$0xff]
      %v237 = vld [vmem:[%s218 + $0x20] sm:$0xff]
      %v238 = vld [vmem:[%s218 + $0x28] sm:$0xff]
      %v239 = vld [vmem:[%s218 + $0x30] sm:$0xff]
      %v240 = vld [vmem:[%s218 + $0x38] sm:$0xff]
      %v241 = vld [vmem:[%s213] sm:$0xff]
      %v242 = vld [vmem:[%s213 + $0x8] sm:$0xff]
      %v243 = vld [vmem:[%s223] sm:$0xff]
      %v244 = vld [vmem:[%s223 + $0x8] sm:$0xff]
      %v245 = vld [vmem:[%s223 + $0x10] sm:$0xff]
      %v246 = vld [vmem:[%s223 + $0x18] sm:$0xff]
      %v247 = vld [vmem:[%s223 + $0x20] sm:$0xff]
      %v248 = vld [vmem:[%s223 + $0x28] sm:$0xff]
      %v249 = vld [vmem:[%s223 + $0x30] sm:$0xff]
      %v250 = vld [vmem:[%s223 + $0x38] sm:$0xff]
      %252 = vset.pattern.permute.xlu0 0
      %253 = vperm.xlu0 %252, %v243
      %v254 = vpop.permute.xlu0 %253
      %257 = vset.pattern.permute.xlu0 0
      %258 = vperm.xlu0 %257, %v244
      %v259 = vpop.permute.xlu0 %258
      %262 = vset.pattern.permute.xlu0 0
      %263 = vperm.xlu0 %262, %v245
      %v264 = vpop.permute.xlu0 %263
      %267 = vset.pattern.permute.xlu0 0
      %268 = vperm.xlu0 %267, %v246
      %v269 = vpop.permute.xlu0 %268
      %272 = vset.pattern.permute.xlu0 0
      %273 = vperm.xlu0 %272, %v247
      %v274 = vpop.permute.xlu0 %273
      %277 = vset.pattern.permute.xlu0 0
      %278 = vperm.xlu0 %277, %v248
      %v279 = vpop.permute.xlu0 %278
      %282 = vset.pattern.permute.xlu0 0
      %283 = vperm.xlu0 %282, %v249
      %v284 = vpop.permute.xlu0 %283
      %287 = vset.pattern.permute.xlu0 0
      %288 = vperm.xlu0 %287, %v250
      %v289 = vpop.permute.xlu0 %288
      %vm291 = vcmask 130048
      %v293 = vsel %vm291, %v233, 0
      %v296 = vsel %vm291, %v234, 0
      %v299 = vsel %vm291, %v235, 0
      %v302 = vsel %vm291, %v236, 0
      %v305 = vsel %vm291, %v237, 0
      %v308 = vsel %vm291, %v238, 0
      %v311 = vsel %vm291, %v239, 0
      %v314 = vsel %vm291, %v240, 0
      %316 = vmatprep.subr.mxu0 0.0
      %317 = vmatpush1.msra.mxu0 %v241
      %318 = vmatprep.subr.mxu0 0.0
      %319 = vmatpush1.msra.mxu0 %v242
      %320 = vmatprep.subr.mxu0 0.0
      %321 = vmatpush1.msra.mxu0 0.0
      %322 = vmatprep.subr.mxu0 0.0
      %323 = vmatpush1.msra.mxu0 0.0
      %324 = vmatprep.subr.mxu0 0.0
      %325 = vmatpush1.msra.mxu0 0.0
      %326 = vmatprep.subr.mxu0 0.0
      %327 = vmatpush1.msra.mxu0 0.0
      %328 = vmatprep.subr.mxu0 0.0
      %329 = vmatpush1.msra.mxu0 0.0
      %330 = vmatprep.subr.mxu0 0.0
      %331 = vmatpush1.msra.mxu0 0.0
      %332 = vmatprep.subr.mxu0 0.0
      %333 = vmatpush1.msra.mxu0 0.0
      %334 = vmatprep.subr.mxu0 0.0
      %335 = vmatpush1.msra.mxu0 0.0
      %336 = vmatprep.subr.mxu0 0.0
      %337 = vmatpush1.msra.mxu0 0.0
      %338 = vmatprep.subr.mxu0 0.0
      %339 = vmatpush1.msra.mxu0 0.0
      %340 = vmatprep.subr.mxu0 0.0
      %341 = vmatpush1.msra.mxu0 0.0
      %342 = vmatprep.subr.mxu0 0.0
      %343 = vmatpush1.msra.mxu0 0.0
      %344 = vmatprep.subr.mxu0 0.0
      %345 = vmatpush1.msra.mxu0 0.0
      %346 = vmatprep.subr.mxu0 0.0
      %347 = vmatpush1.msra.mxu0 0.0
      %348 = vmatprep.subr.mxu0 0.0
      %349 = vmatpush1.msra.mxu0 0.0
      %350 = vmatprep.subr.mxu0 0.0
      %351 = vmatpush1.msra.mxu0 0.0
      %352 = vmatprep.subr.mxu0 0.0
      %353 = vmatpush1.msra.mxu0 0.0
      %354 = vmatprep.subr.mxu0 0.0
      %355 = vmatpush1.msra.mxu0 0.0
      %356 = vmatprep.subr.mxu0 0.0
      %357 = vmatpush1.msra.mxu0 0.0
      %358 = vmatprep.subr.mxu0 0.0
      %359 = vmatpush1.msra.mxu0 0.0
      %360 = vmatprep.subr.mxu0 0.0
      %361 = vmatpush1.msra.mxu0 0.0
      %362 = vmatprep.subr.mxu0 0.0
      %363 = vmatpush1.msra.mxu0 0.0
      %364 = vmatprep.subr.mxu0 0.0
      %365 = vmatpush1.msra.mxu0 0.0
      %366 = vmatprep.subr.mxu0 0.0
      %367 = vmatpush1.msra.mxu0 0.0
      %368 = vmatprep.subr.mxu0 0.0
      %369 = vmatpush1.msra.mxu0 0.0
      %370 = vmatprep.subr.mxu0 0.0
      %371 = vmatpush1.msra.mxu0 0.0
      %372 = vmatprep.subr.mxu0 0.0
      %373 = vmatpush1.msra.mxu0 0.0
      %374 = vmatprep.subr.mxu0 0.0
      %375 = vmatpush1.msra.mxu0 0.0
      %376 = vmatprep.subr.mxu0 0.0
      %377 = vmatpush1.msra.mxu0 0.0
      %378 = vmatprep.subr.mxu0 0.0
      %379 = vmatpush1.msra.mxu0 0.0
      %380 = vmatprep.mubr.f32.mxu0 0.0
      %381 = vmatmul.mubr.f32.gmra.mrb[0].mxu0 %v293
      %v382 = vpop.f32.mrb[0].mxu0
      %v383 = vadd.f32 %v254, %v382
      %v384 = vpop.f32.mrb[0].mxu0
      %385 = vmatprep.mubr.f32.mxu0 0.0
      %386 = vmatmul.mubr.f32.gmra.mrb[0].mxu0 %v296
      %v387 = vpop.f32.mrb[0].mxu0
      %v388 = vadd.f32 %v259, %v387
      %v389 = vpop.f32.mrb[0].mxu0
      %390 = vmatprep.mubr.f32.mxu0 0.0
      %391 = vmatmul.mubr.f32.gmra.mrb[0].mxu0 %v299
      %v392 = vpop.f32.mrb[0].mxu0
      %v393 = vadd.f32 %v264, %v392
      %v394 = vpop.f32.mrb[0].mxu0
      %395 = vmatprep.mubr.f32.mxu0 0.0
      %396 = vmatmul.mubr.f32.gmra.mrb[0].mxu0 %v302
      %v397 = vpop.f32.mrb[0].mxu0
      %v398 = vadd.f32 %v269, %v397
      %v399 = vpop.f32.mrb[0].mxu0
      %400 = vmatprep.mubr.f32.mxu0 0.0
      %401 = vmatmul.mubr.f32.gmra.mrb[0].mxu0 %v305
      %v402 = vpop.f32.mrb[0].mxu0
      %v403 = vadd.f32 %v274, %v402
      %v404 = vpop.f32.mrb[0].mxu0
      %405 = vmatprep.mubr.f32.mxu0 0.0
      %406 = vmatmul.mubr.f32.gmra.mrb[0].mxu0 %v308
      %v407 = vpop.f32.mrb[0].mxu0
      %v408 = vadd.f32 %v279, %v407
      %v409 = vpop.f32.mrb[0].mxu0
      %410 = vmatprep.mubr.f32.mxu0 0.0
      %411 = vmatmul.mubr.f32.gmra.mrb[0].mxu0 %v311
      %v412 = vpop.f32.mrb[0].mxu0
      %v413 = vadd.f32 %v284, %v412
      %v414 = vpop.f32.mrb[0].mxu0
      %415 = vmatprep.mubr.f32.mxu0 0.0
      %416 = vmatmul.mubr.f32.gmra.mrb[0].mxu0 %v314
      %v417 = vpop.f32.mrb[0].mxu0
      %v418 = vadd.f32 %v289, %v417
      %v419 = vpop.f32.mrb[0].mxu0
      %420 = vdwg.mxu0
      %vm421 = vcmask 64512
      %422 = vst.msk [vmem:[%s232] sm:$0xff] %vm421, %v383
      %423 = vst.msk [vmem:[%s232 + $0x8] sm:$0xff] %vm421, %v388
      %424 = vst.msk [vmem:[%s232 + $0x10] sm:$0xff] %vm421, %v393
      %425 = vst.msk [vmem:[%s232 + $0x18] sm:$0xff] %vm421, %v398
      %426 = vst.msk [vmem:[%s232 + $0x20] sm:$0xff] %vm421, %v403
      %427 = vst.msk [vmem:[%s232 + $0x28] sm:$0xff] %vm421, %v408
      %428 = vst.msk [vmem:[%s232 + $0x30] sm:$0xff] %vm421, %v413
      %429 = vst.msk [vmem:[%s232 + $0x38] sm:$0xff] %vm421, %v418
      %p430 = scmp.lt.s32.totalorder %s18, 1
      %s431 = scalar_select %p430, %s18, 1
      %p432 = scmp.lt.s32.totalorder %s19, 1
      %s433 = scalar_select %p432, %s19, 1
      %s434 = smul.addr %s433, 8
      %s435 = smul.addr %s431, 16
      %s436 = sadd.s32 %s434, %s435
      %s437 = smul.addr %s436, 8
      %s438 = scalar_lea.vmem %s3, %s437
      // Predicated region
      $region33: #{model_forward.3} parent=31 // pred_check
        %p439 = pneg %p124
      $region34: #{model_forward.3} parent=31 // pred_check_branch
        %441 = sbr.rel (%p439) target = $region36
      $region35: #{model_forward.3} parent=31 // pred_region
        _
      $region36: #{model_forward.3} parent=31 // pred_fallthru
        _
    $region32: #{model_forward.3} parent=5 // pred_fallthru
      _
    %p442 = scmp.le.s32.totalorder 2, %s9
    // Predicated region
    $region37: #{model_forward.3} parent=5 // pred_check
      %p443 = pneg %p442
    $region38: #{model_forward.3} parent=5 // pred_check_branch
      %445 = sbr.rel (%p443) target = $region40
    $region39: #{model_forward.3} parent=5 // pred_region
      %s446 = ssub.s32 %s9, 2
      // Predicated region
      $region41: #{model_forward.3} parent=39 // pred_check
        %p447 = pneg %p130
      $region42: #{model_forward.3} parent=39 // pred_check_branch
        %449 = sbr.rel (%p447) target = $region44
      $region43: #{model_forward.3} parent=39 // pred_region
        %p450 = scmp.lt.s32.totalorder %s20, 1
        %s451 = scalar_select %p450, %s20, 1
        %p452 = scmp.lt.s32.totalorder %s21, 1
        %s453 = scalar_select %p452, %s21, 1
        %s454 = smul.addr %s453, 8
        %s455 = smul.addr %s451, 16
        %s456 = sadd.s32 %s454, %s455
        %s457 = smul.addr %s456, 8
        %s458 = scalar_lea.vmem %s3, %s457
      $region44: #{model_forward.3} parent=39 // pred_fallthru
        _
    $region40: #{model_forward.3} parent=5 // pred_fallthru
      _
  $region6: #{model_forward.3} parent=0 // loop_footer
    %s13 = sadd.s32 1, %s9
  $region7: #{model_forward.3} parent=0 // loop_footer_branch
    %8 = sbr.rel target = $region3
  $region8: #{model_forward.3} parent=0 // loop_exit
    _

// kernel: model_forward.5
$region0: #{model_forward.5}
  #allocation0 [shape = 'u32[]', space=smem, size = 0x4, offset = 0x4, fixed_abs, tag = 'smem constant byte address 0x4 - core index']
  #allocation1 [shape = 'u32[144,128]{1,0:T(1,128)}', space=vmem, size = 0x12000, scoped, tag = 'internal scratch']
  %s0 = inlined_call_operand.vmem [shape: f32[2,256], index: 0, kind: input, shape index: {}]
  %s1 = inlined_call_operand.vmem [shape: f32[256,7], index: 1, kind: input, shape index: {}]
  %s2 = inlined_call_operand.vmem [shape: f32[1,7], index: 2, kind: input, shape index: {}]
  %s3 = inlined_call_operand.hbm [shape: f32[2,7], index: 3, kind: output, shape index: {}]
  %s4 = sld [smem:[#allocation0]]
  $region49: #{model_forward.5} parent=0
    _
  %s6 = ssub.s32 1, %s4
  %s7 = scalar_select 0, %s6, %s4
  $region1: #{model_forward.5} parent=0
    #allocation2 [shape = 'u8[1024]{0}', space=vmem, size = 0x400, scoped, tag = 'output window, operand 0, single buffered']
    #allocation3 [shape = 's32[2]{0}', space=sflag, size = 0x8, scoped, tag = 'scoped memory for model_forward.5']
    %8 = vsyncpa [#allocation3], 0
    loop: start=0, step=1, limit=4
    $region2: #{model_forward.5} parent=1 // loop_pre_header
      _
    $region3: #{model_forward.5} parent=1 // loop_header
      %s10 = sphi 0, %s14
      %p11 = scmp.ge.s32.totalorder %s10, 4
      %s20 = sphi 0, %s22
      %s23 = sphi 0, %s20
      %s24 = sphi 0, %s23
      %s40 = sphi 0, %s24
      %s46 = sphi 0, %s48
      %s49 = sphi 0, %s46
      %s50 = sphi 0, %s49
      %s66 = sphi 0, %s50
      %s70 = sphi 0, %s70
      %s72 = sphi 0, %s70
      %s73 = sphi 0, %s72
      %s87 = sphi 0, %s73
      %s91 = sphi 0, %s91
      %s93 = sphi 0, %s91
      %s94 = sphi 0, %s93
      %s108 = sphi 0, %s94
    $region4: #{model_forward.5} parent=1 // loop_header_branch
      %13 = sbr.rel (%p11) target = $region8
    $region5: #{model_forward.5} parent=1 // loop_body
      %s15 = ssub.s32 %s10, 1
      %s16 = ssub.s32 %s10, 2
      %s17 = sadd.s32 %s10, 1
      %s18 = ssub.s32 %s10, %s17
      %p19 = scmp.eq.s32.totalorder %s18, 0
      %s21 = sadd.s32 %s20, 1
      %s22 = scalar_select %p19, %s20, %s21
      %p25 = pneg %p19
      %p26 = scmp.eq.s32.totalorder %s10, 1
      %p27 = por %p25, %p26
      %p28 = scmp.ne.s32.totalorder %s20, %s23
      %p29 = scmp.eq.s32.totalorder %s10, 0
      %p30 = por %p28, %p29
      %p31 = scmp.ne.s32.totalorder %s20, %s23
      %p32 = scmp.eq.s32.totalorder %s15, 1
      %p33 = por %p31, %p32
      %p34 = scmp.ne.s32.totalorder %s23, %s24
      %p35 = scmp.eq.s32.totalorder %s15, 0
      %p36 = por %p34, %p35
      %p37 = scmp.ne.s32.totalorder %s23, %s24
      %p38 = scmp.eq.s32.totalorder %s16, 1
      %p39 = por %p37, %p38
      %p41 = scmp.ne.s32.totalorder %s24, %s40
      %p42 = scmp.eq.s32.totalorder %s16, 0
      %p43 = por %p41, %p42
      %s44 = ssub.s32 %s10, %s17
      %p45 = scmp.eq.s32.totalorder %s44, 0
      %s47 = sadd.s32 %s46, 1
      %s48 = scalar_select %p45, %s46, %s47
      %p51 = pneg %p45
      %p52 = scmp.eq.s32.totalorder %s10, 1
      %p53 = por %p51, %p52
      %p54 = scmp.ne.s32.totalorder %s46, %s49
      %p55 = scmp.eq.s32.totalorder %s10, 0
      %p56 = por %p54, %p55
      %p57 = scmp.ne.s32.totalorder %s46, %s49
      %p58 = scmp.eq.s32.totalorder %s15, 1
      %p59 = por %p57, %p58
      %p60 = scmp.ne.s32.totalorder %s49, %s50
      %p61 = scmp.eq.s32.totalorder %s15, 0
      %p62 = por %p60, %p61
      %p63 = scmp.ne.s32.totalorder %s49, %s50
      %p64 = scmp.eq.s32.totalorder %s16, 1
      %p65 = por %p63, %p64
      %p67 = scmp.ne.s32.totalorder %s50, %s66
      %p68 = scmp.eq.s32.totalorder %s16, 0
      %p69 = por %p67, %p68
      %s71 = sadd.s32 %s70, 1
      %p74 = scmp.eq.s32.totalorder %s10, 1
      %p75 = scmp.ne.s32.totalorder %s70, %s72
      %p76 = scmp.eq.s32.totalorder %s10, 0
      %p77 = por %p75, %p76
      %p78 = scmp.ne.s32.totalorder %s70, %s72
      %p79 = scmp.eq.s32.totalorder %s15, 1
      %p80 = por %p78, %p79
      %p81 = scmp.ne.s32.totalorder %s72, %s73
      %p82 = scmp.eq.s32.totalorder %s15, 0
      %p83 = por %p81, %p82
      %p84 = scmp.ne.s32.totalorder %s72, %s73
      %p85 = scmp.eq.s32.totalorder %s16, 1
      %p86 = por %p84, %p85
      %p88 = scmp.ne.s32.totalorder %s73, %s87
      %p89 = scmp.eq.s32.totalorder %s16, 0
      %p90 = por %p88, %p89
      %s92 = sadd.s32 %s91, 1
      %p95 = scmp.eq.s32.totalorder %s10, 1
      %p96 = scmp.ne.s32.totalorder %s91, %s93
      %p97 = scmp.eq.s32.totalorder %s10, 0
      %p98 = por %p96, %p97
      %p99 = scmp.ne.s32.totalorder %s91, %s93
      %p100 = scmp.eq.s32.totalorder %s15, 1
      %p101 = por %p99, %p100
      %p102 = scmp.ne.s32.totalorder %s93, %s94
      %p103 = scmp.eq.s32.totalorder %s15, 0
      %p104 = por %p102, %p103
      %p105 = scmp.ne.s32.totalorder %s93, %s94
      %p106 = scmp.eq.s32.totalorder %s16, 1
      %p107 = por %p105, %p106
      %p109 = scmp.ne.s32.totalorder %s94, %s108
      %p110 = scmp.eq.s32.totalorder %s16, 0
      %p111 = por %p109, %p110
      %p112 = scmp.le.s32.totalorder 1, %s10
      %p113 = scmp.lt.s32.totalorder %s10, 3
      %p114 = pnand %p112, %p113
      %p115 = pneg %p114
      // Predicated region
      $region9: #{model_forward.5} parent=5 // pred_check
        _
      $region10: #{model_forward.5} parent=5 // pred_check_branch
        %117 = sbr.rel (%p114) target = $region12
      $region11: #{model_forward.5} parent=5 // pred_region
        %s118 = ssub.s32 %s10, 1
        // Predicated region
        $region13: #{model_forward.5} parent=11 // pred_check
          %p119 = pneg %p83
        $region14: #{model_forward.5} parent=11 // pred_check_branch
          %121 = sbr.rel (%p119) target = $region16
        $region15: #{model_forward.5} parent=11 // pred_region
          _
        $region16: #{model_forward.5} parent=11 // pred_fallthru
          _
      $region12: #{model_forward.5} parent=5 // pred_fallthru
        _
      %p122 = scmp.lt.s32.totalorder %s10, 2
      // Predicated region
      $region17: #{model_forward.5} parent=5 // pred_check
        %p123 = pneg %p122
      $region18: #{model_forward.5} parent=5 // pred_check_branch
        %125 = sbr.rel (%p123) target = $region20
      $region19: #{model_forward.5} parent=5 // pred_region
        // Predicated region
        $region21: #{model_forward.5} parent=19 // pred_check
          %p126 = pneg %p30
        $region22: #{model_forward.5} parent=19 // pred_check_branch
          %128 = sbr.rel (%p126) target = $region24
        $region23: #{model_forward.5} parent=19 // pred_region
          %p129 = scmp.lt.s32.totalorder %s10, 1
          %s130 = scalar_select %p129, %s10, 1
          %s131 = smul.addr %s130, 2
          %s132 = scalar_lea.vmem %s0, %s131
        $region24: #{model_forward.5} parent=19 // pred_fallthru
          _
        // Predicated region
        $region25: #{model_forward.5} parent=19 // pred_check
          %p133 = pneg %p56
        $region26: #{model_forward.5} parent=19 // pred_check_branch
          %135 = sbr.rel (%p133) target = $region28
        $region27: #{model_forward.5} parent=19 // pred_region
          %s136 = smul.u32 16, %s10
          %p137 = scmp.lt.s32.totalorder %s136, 31
          %s138 = scalar_select %p137, %s136, 31
          %s139 = smul.addr %s138, 8
          %s140 = scalar_lea.vmem %s1, %s139
          %s141 = smul.u32 16, %s10
        $region28: #{model_forward.5} parent=19 // pred_fallthru
          _
      $region20: #{model_forward.5} parent=5 // pred_fallthru
        _
      %p142 = scmp.le.s32.totalorder 1, %s10
      %p143 = scmp.lt.s32.totalorder %s10, 3
      %p144 = pnand %p142, %p143
      %p145 = pneg %p144
      // Predicated region
      $region29: #{model_forward.5} parent=5 // pred_check
        _
      $region30: #{model_forward.5} parent=5 // pred_check_branch
        %147 = sbr.rel (%p144) target = $region32
      $region31: #{model_forward.5} parent=5 // pred_region
        %s148 = ssub.s32 %s10, 1
        %p149 = scmp.lt.s32.totalorder %s15, 1
        %s150 = scalar_select %p149, %s15, 1
        %s151 = smul.addr %s150, 2
        %s152 = scalar_lea.vmem %s0, %s151
        %p153 = pneg %p36
        %p154 = pneg %p33
        %s155 = smul.u32 16, %s15
        %p156 = scmp.lt.s32.totalorder %s155, 31
        %s157 = scalar_select %p156, %s155, 31
        %s158 = smul.addr %s157, 8
        %s159 = scalar_lea.vmem %s1, %s158
        %p160 = pneg %p62
        %p161 = pneg %p59
        %p162 = pneg %p83
        %p163 = pneg %p80
        %p164 = pneg %p104
        %p165 = pneg %p101
        %p166 = scmp.lt.s32.totalorder %s15, 1
        %s167 = scalar_select %p166, %s15, 1
        %s168 = smul.addr %s167, 2
        %s169 = scalar_lea.vmem %s0, %s168
        %s170 = smul.u32 16, %s15
        %p171 = scmp.lt.s32.totalorder %s170, 31
        %s172 = scalar_select %p171, %s170, 31
        %s173 = smul.addr %s172, 8
        %s174 = scalar_lea.vmem %s1, %s173
        %s175 = smul.u32 16, %s15
        %p176 = scmp.eq.s32.totalorder %s15, 0
        // Predicated region
        $region33: #{model_forward.5} parent=31 // pred_check
          %p177 = pneg %p176
        $region34: #{model_forward.5} parent=31 // pred_check_branch
          %179 = sbr.rel (%p177) target = $region36
        $region35: #{model_forward.5} parent=31 // pred_region
          %v180 = vld [vmem:[%s2] sm:$0x1]
          %v182 = vlaneseq
          %v183 = vshrl.u32 %v182, 7
          %v184 = vsub.s32 0, %v183
          %v185 = vrot.slane %v180, %v184
          %vm187 = vcmask 50176
          %188 = vst.msk [vmem:[#allocation2] sm:$0x3] %vm187, %v185
        $region36: #{model_forward.5} parent=31 // pred_fallthru
          _
        %v189 = vld [vmem:[#allocation2] sm:$0x3]
        %v190 = vld [vmem:[%s169] sm:$0x3]
        %v191 = vld [vmem:[%s174] sm:$0xff]
        %v192 = vld [vmem:[%s174 + $0x8] sm:$0xff]
        %v193 = vld [vmem:[%s174 + $0x10] sm:$0xff]
        %v194 = vld [vmem:[%s174 + $0x18] sm:$0xff]
        %v195 = vld [vmem:[%s174 + $0x20] sm:$0xff]
        %v196 = vld [vmem:[%s174 + $0x28] sm:$0xff]
        %v197 = vld [vmem:[%s174 + $0x30] sm:$0xff]
        %v198 = vld [vmem:[%s174 + $0x38] sm:$0xff]
        %v199 = vld [vmem:[%s174 + $0x40] sm:$0xff]
        %v200 = vld [vmem:[%s174 + $0x48] sm:$0xff]
        %v201 = vld [vmem:[%s174 + $0x50] sm:$0xff]
        %v202 = vld [vmem:[%s174 + $0x58] sm:$0xff]
        %v203 = vld [vmem:[%s174 + $0x60] sm:$0xff]
        %v204 = vld [vmem:[%s174 + $0x68] sm:$0xff]
        %v205 = vld [vmem:[%s174 + $0x70] sm:$0xff]
        %v206 = vld [vmem:[%s174 + $0x78] sm:$0xff]
        %207 = vmatprep.subr.mxu0 0.0
        %208 = vmatpush1.msra.mxu0 %v191
        %209 = vmatprep.subr.mxu0 0.0
        %210 = vmatpush1.msra.mxu0 %v192
        %211 = vmatprep.subr.mxu0 0.0
        %212 = vmatpush1.msra.mxu0 %v193
        %213 = vmatprep.subr.mxu0 0.0
        %214 = vmatpush1.msra.mxu0 %v194
        %215 = vmatprep.subr.mxu0 0.0
        %216 = vmatpush1.msra.mxu0 %v195
        %217 = vmatprep.subr.mxu0 0.0
        %218 = vmatpush1.msra.mxu0 %v196
        %219 = vmatprep.subr.mxu0 0.0
        %220 = vmatpush1.msra.mxu0 %v197
        %221 = vmatprep.subr.mxu0 0.0
        %222 = vmatpush1.msra.mxu0 %v198
        %223 = vmatprep.subr.mxu0 0.0
        %224 = vmatpush1.msra.mxu0 %v199
        %225 = vmatprep.subr.mxu0 0.0
        %226 = vmatpush1.msra.mxu0 %v200
        %227 = vmatprep.subr.mxu0 0.0
        %228 = vmatpush1.msra.mxu0 %v201
        %229 = vmatprep.subr.mxu0 0.0
        %230 = vmatpush1.msra.mxu0 %v202
        %231 = vmatprep.subr.mxu0 0.0
        %232 = vmatpush1.msra.mxu0 %v203
        %233 = vmatprep.subr.mxu0 0.0
        %234 = vmatpush1.msra.mxu0 %v204
        %235 = vmatprep.subr.mxu0 0.0
        %236 = vmatpush1.msra.mxu0 %v205
        %237 = vmatprep.subr.mxu0 0.0
        %238 = vmatpush1.msra.mxu0 %v206
        %239 = vmatprep.subr.mxu0 0.0
        %240 = vmatpush1.msra.mxu0 0.0
        %241 = vmatprep.subr.mxu0 0.0
        %242 = vmatpush1.msra.mxu0 0.0
        %243 = vmatprep.subr.mxu0 0.0
        %244 = vmatpush1.msra.mxu0 0.0
        %245 = vmatprep.subr.mxu0 0.0
        %246 = vmatpush1.msra.mxu0 0.0
        %247 = vmatprep.subr.mxu0 0.0
        %248 = vmatpush1.msra.mxu0 0.0
        %249 = vmatprep.subr.mxu0 0.0
        %250 = vmatpush1.msra.mxu0 0.0
        %251 = vmatprep.subr.mxu0 0.0
        %252 = vmatpush1.msra.mxu0 0.0
        %253 = vmatprep.subr.mxu0 0.0
        %254 = vmatpush1.msra.mxu0 0.0
        %255 = vmatprep.subr.mxu0 0.0
        %256 = vmatpush1.msra.mxu0 0.0
        %257 = vmatprep.subr.mxu0 0.0
        %258 = vmatpush1.msra.mxu0 0.0
        %259 = vmatprep.subr.mxu0 0.0
        %260 = vmatpush1.msra.mxu0 0.0
        %261 = vmatprep.subr.mxu0 0.0
        %262 = vmatpush1.msra.mxu0 0.0
        %263 = vmatprep.subr.mxu0 0.0
        %264 = vmatpush1.msra.mxu0 0.0
        %265 = vmatprep.subr.mxu0 0.0
        %266 = vmatpush1.msra.mxu0 0.0
        %267 = vmatprep.subr.mxu0 0.0
        %268 = vmatpush1.msra.mxu0 0.0
        %269 = vmatprep.subr.mxu0 0.0
        %270 = vmatpush1.msra.mxu0 0.0
        %271 = vmatprep.mubr.f32.mxu0 0.0
        %272 = vmatmul.mubr.f32.gmra.mrb[0].mxu0 %v190
        %v273 = vpop.f32.mrb[0].mxu0
        %v274 = vadd.f32 0.0, %v273
        %v275 = vpop.f32.mrb[0].mxu0
        %276 = vdwg.mxu0
        %v277 = vadd.f32 %v189, %v274
        %vm278 = vcmask 50176
        %279 = vst.msk [vmem:[#allocation2] sm:$0x3] %vm278, %v277
        // Predicated region
        $region37: #{model_forward.5} parent=31 // pred_check
          %p280 = pneg %p101
        $region38: #{model_forward.5} parent=31 // pred_check_branch
          %282 = sbr.rel (%p280) target = $region40
        $region39: #{model_forward.5} parent=31 // pred_region
          %s284 = ssub.s32 32, 32
          %285 = vsyncadd [#allocation3], %s284
          %s287 = sshll.u32 [#allocation2], 4
          %s288 = int_to_ptr.vmem [resolvable:$true] %s287
          %290 = dma.vmem_to_hbm [thread:$0]  %s288, 32, %s3, [#allocation3]
        $region40: #{model_forward.5} parent=31 // pred_fallthru
          _
        // Predicated region
        $region41: #{model_forward.5} parent=31 // pred_check
          %p291 = pneg %p101
        $region42: #{model_forward.5} parent=31 // pred_check_branch
          %293 = sbr.rel (%p291) target = $region44
        $region43: #{model_forward.5} parent=31 // pred_region
          %294 = dma.done [#allocation3], 32
        $region44: #{model_forward.5} parent=31 // pred_fallthru
          _
      $region32: #{model_forward.5} parent=5 // pred_fallthru
        _
      %p295 = scmp.le.s32.totalorder 2, %s10
      // Predicated region
      $region45: #{model_forward.5} parent=5 // pred_check
        %p296 = pneg %p295
      $region46: #{model_forward.5} parent=5 // pred_check_branch
        %298 = sbr.rel (%p296) target = $region48
      $region47: #{model_forward.5} parent=5 // pred_region
        %s299 = ssub.s32 %s10, 2
      $region48: #{model_forward.5} parent=5 // pred_fallthru
        _
    $region6: #{model_forward.5} parent=1 // loop_footer
      %s14 = sadd.s32 1, %s10
    $region7: #{model_forward.5} parent=1 // loop_footer_branch
      %9 = sbr.rel target = $region3
    $region8: #{model_forward.5} parent=1 // loop_exit
      _
    %300 = vsyncpa [#allocation3], 1
    %s301 = scalar_lea.sflag [#allocation3], 1
    %302 = vsyncpa %s301, 1

</llo_original>
